<compile_context>
chip_gen: v5e
topology: v5e:2x2
jax: 0.10.0
libtpu: 0.0.40
codegen_flags: <defaults>
</compile_context>

<pallas_src>
import numpy as np
import jax
import jax.numpy as jnp
from jax import lax
from jax.experimental import pallas as pl
from jax.experimental.pallas import tpu as pltpu

KSIZE = 7
PAD = KSIZE // 2  # 3

_VMEM_BUDGET_BYTES = 36 << 20   # accounted buffer budget (fits v7x's 64 MiB VMEM)
_VMEM_LIMIT_BYTES = 48 << 20    # scoped-VMEM limit handed to Mosaic


def _gaussian_taps_1d():
    """1-D response of scipy.ndimage.gaussian_filter(sigma=1) to a length-7 delta.

    gaussian_filter is separable and the 7x7x7 delta is separable, so the 3-D
    kernel used by GaussianLayer_3D is exactly the outer product r (x) r (x) r
    of this 7-tap response (9-tap Gaussian, radius int(4*sigma+0.5)=4,
    'reflect' boundary == numpy 'symmetric' pad).
    """
    sigma = 1.0
    radius = int(4.0 * sigma + 0.5)  # 4
    xs = np.arange(-radius, radius + 1, dtype=np.float64)
    w1d = np.exp(-0.5 * xs * xs / (sigma * sigma))
    w1d /= w1d.sum()
    delta = np.zeros(KSIZE, dtype=np.float64)
    delta[KSIZE // 2] = 1.0
    ext = np.pad(delta, radius, mode="symmetric")  # scipy ndimage 'reflect'
    return np.convolve(ext, w1d, mode="valid")     # (7,) float64, symmetric


# D-pass taps baked as (f32-rounded) compile-time Python constants.
TAPS = tuple(float(np.float32(v)) for v in _gaussian_taps_1d())


def make_gaussian_weights():
    """Full 7x7x7 kernel (used only by the conv reference in __main__)."""
    r = _gaussian_taps_1d()
    k3 = r[:, None, None] * r[None, :, None] * r[None, None, :]
    return jnp.asarray(k3, dtype=jnp.float32)


def _band_matrix(n):
    """(n, n) banded matrix M with M[i, i + t - PAD] = tap[t].

    Out-of-range taps are clipped, which folds the zero 'same' padding into the
    matmul.  The taps are symmetric, so M works both as a pre-multiplier
    (H pass, u = M @ s) and a post-multiplier (W pass, v = u @ M).
    """
    r = _gaussian_taps_1d()
    m = np.zeros((n, n), dtype=np.float64)
    for i in range(n):
        for t in range(KSIZE):
            k = i + t - PAD
            if 0 <= k < n:
                m[i, k] = r[t]
    return m


def _pick_d_tile(n, d, h, w, budget_bytes=_VMEM_BUDGET_BYTES):
    """Pick (td, pad_d): D-tile size from a VMEM byte budget + a megacore floor."""
    slice_bytes = 4 * h * w
    # Per-step VMEM: double-buffered in + out blocks (4*td slices), two
    # PAD-deep halo scratches, and the two resident (double-buffered) band mats.
    fixed = 2 * PAD * slice_bytes + 8 * (h * h + w * w)
    avail = max(budget_bytes - fixed, 4 * PAD * slice_bytes)
    td_max = max(PAD, avail // (4 * slice_bytes))
    # Keep >= 4 grid steps when it costs little so both v7x TensorCores get work.
    want_tiles = -(-4 // max(n, 1))
    if want_tiles > 1:
        td_max = min(td_max, max(PAD, -(-d // want_tiles)))
    td_cap = int(max(PAD, min(td_max, d)))
    if d <= td_cap:
        return d, 0
    for t in range(td_cap, PAD - 1, -1):   # prefer a divisor of d: no padding
        if d % t == 0:
            return t, 0
    return td_cap, (-d) % td_cap           # no divisor: zero-pad D up


def _build_kernel(n_d_tiles, td, h, w):
    last = n_d_tiles - 1
    int_lo = min(PAD, td)                  # interior slices only touch the
    int_hi = max(int_lo, td - PAD)         # centre block; boundary ones don't.
    boundary = tuple(range(0, int_lo)) + tuple(range(int_hi, td))

    def kernel(a_ref, b_ref, x_c_ref, x_hbm_ref, o_ref, halo_lo, halo_hi, sems):
        n = pl.program_id(0)
        dt = pl.program_id(1)

        # ---- launch guarded halo DMAs (skipped at the volume boundary) ------
        if n_d_tiles > 1:
            @pl.when(dt > 0)
            def _():
                pltpu.make_async_copy(
                    x_hbm_ref.at[n, pl.ds(dt * td - PAD, PAD)], halo_lo,
                    sems.at[0]).start()

            @pl.when(dt < last)
            def _():
                pltpu.make_async_copy(
                    x_hbm_ref.at[n, pl.ds(dt * td + td, PAD)], halo_hi,
                    sems.at[1]).start()

            @pl.when(dt == 0)
            def _():
                halo_lo[...] = jnp.zeros_like(halo_lo)

            @pl.when(dt == last)
            def _():
                halo_hi[...] = jnp.zeros_like(halo_hi)
        else:
            halo_lo[...] = jnp.zeros_like(halo_lo)
            halo_hi[...] = jnp.zeros_like(halo_hi)

        def hw_passes_and_store(dd, s):
            # H pass then W pass on the MXU as banded constant matmuls; the
            # band matrices already encode the zero 'same' boundary.
            u = jnp.dot(a_ref[...], s, preferred_element_type=jnp.float32)
            v = jnp.dot(u, b_ref[...], preferred_element_type=jnp.float32)
            o_ref[0, dd] = v.astype(o_ref.dtype)

        # ---- interior slices: all 7 D taps live in the centre block, so they
        #      run while the halo DMAs are still in flight. --------------------
        if int_hi > int_lo:
            def interior(dd, carry):
                s = TAPS[0] * x_c_ref[0, dd - PAD]
                for t in range(1, KSIZE):
                    s = s + TAPS[t] * x_c_ref[0, dd - PAD + t]
                hw_passes_and_store(dd, s)
                return carry

            lax.fori_loop(int_lo, int_hi, interior, 0, unroll=2)

        # ---- boundary slices need the halos: wait, then finish them. --------
        if n_d_tiles > 1:
            @pl.when(dt > 0)
            def _():
                pltpu.make_async_copy(
                    x_hbm_ref.at[n, pl.ds(dt * td - PAD, PAD)], halo_lo,
                    sems.at[0]).wait()

            @pl.when(dt < last)
            def _():
                pltpu.make_async_copy(
                    x_hbm_ref.at[n, pl.ds(dt * td + td, PAD)], halo_hi,
                    sems.at[1]).wait()

        def slab(r):   # r: static D offset relative to the centre block
            if r < 0:
                return halo_lo[r + PAD]
            if r >= td:
                return halo_hi[r - td]
            return x_c_ref[0, r]

        for dd in boundary:
            s = TAPS[0] * slab(dd - PAD)
            for t in range(1, KSIZE):
                s = s + TAPS[t] * slab(dd - PAD + t)
            hw_passes_and_store(dd, s)

    return kernel


def _gaussian3d_ndhw(xs):
    """xs: (N, D, H, W) float32 -> same shape; 7^3 Gaussian, zero 'same' pad."""
    n, d, h, w = xs.shape
    td, pad_d = _pick_d_tile(n, d, h, w)
    if pad_d:
        # Zero-extending D is equivalent to the zero 'same' padding; the extra
        # output rows are sliced off below.
        xs = jnp.pad(xs, ((0, 0), (0, pad_d), (0, 0), (0, 0)))
    dp = d + pad_d
    n_d_tiles = dp // td

    a_mat = jnp.asarray(_band_matrix(h), dtype=jnp.float32)   # H pass, (h, h)
    b_mat = jnp.asarray(_band_matrix(w), dtype=jnp.float32)   # W pass, (w, w)

    kernel = _build_kernel(n_d_tiles, td, h, w)
    out = pl.pallas_call(
        kernel,
        out_shape=jax.ShapeDtypeStruct((n, dp, h, w), jnp.float32),
        grid_spec=pltpu.PrefetchScalarGridSpec(
            num_scalar_prefetch=0,
            grid=(n, n_d_tiles),
            in_specs=[
                # band matrices: constant block index -> fetched once, resident
                pl.BlockSpec((h, h), lambda i, j: (0, 0)),
                pl.BlockSpec((w, w), lambda i, j: (0, 0)),
                # centre D tile: auto-pipelined / double-buffered by Pallas
                pl.BlockSpec((1, td, h, w), lambda i, j: (i, j, 0, 0)),
                # raw HBM alias of the same array for the manual halo DMAs
                pl.BlockSpec(memory_space=pl.ANY),
            ],
            out_specs=pl.BlockSpec((1, td, h, w), lambda i, j: (i, j, 0, 0)),
            scratch_shapes=[
                pltpu.VMEM((PAD, h, w), jnp.float32),   # lower D halo
                pltpu.VMEM((PAD, h, w), jnp.float32),   # upper D halo
                pltpu.SemaphoreType.DMA((2,)),
            ],
        ),
        compiler_params=pltpu.CompilerParams(
            dimension_semantics=("parallel", "parallel"),
            vmem_limit_bytes=_VMEM_LIMIT_BYTES,
        ),
    )(a_mat, b_mat, xs, xs)
    if pad_d:
        out = out[:, :d]
    return out


def gaussian_layer_3d(x):
    """Forward of GaussianLayer_3D: x (N, 1, D, H, W) -> (N, 1, D, H, W)."""
    n, c, d, h, w = x.shape
    assert c == 1
    xs = x[:, 0].astype(jnp.float32)

    # Isotropic kernel => spatial axes may be permuted freely.  A transpose is a
    # full HBM round trip (x2 with the inverse), so only pay it when it buys a
    # full 128-lane store axis on a reasonably large volume.
    order = (1, 2, 3)
    if w < 128 and max(d, h, w) >= 128 and d * h * w >= (1 << 20):
        order = tuple(sorted((1, 2, 3), key=lambda a: xs.shape[a]))
    perm = (0,) + order
    transposed = perm != (0, 1, 2, 3)
    if transposed:
        xs = jnp.transpose(xs, perm)

    out = _gaussian3d_ndhw(xs)

    if transposed:
        out = jnp.transpose(out, tuple(int(a) for a in np.argsort(perm)))
    return out[:, None].astype(x.dtype)


def _reference(x, w3):
    # Plain-JAX reference: Conv3d(1, 1, 7, padding='same', bias=False).
    return lax.conv_general_dilated(
        x,
        w3[None, None].astype(jnp.float32),
        window_strides=(1, 1, 1),
        padding=[(PAD, PAD)] * 3,
        dimension_numbers=("NCDHW", "OIDHW", "NCDHW"),
        precision=lax.Precision.HIGHEST,
    )


if __name__ == "__main__":
    w3 = make_gaussian_weights()
    k0, k1, k2, k3 = jax.random.split(jax.random.PRNGKey(0), 4)

    def _check(x, shape):
        out = jax.block_until_ready(gaussian_layer_3d(x))
        ref = jax.block_until_ready(_reference(x, w3))
        assert out.shape == ref.shape == shape
        np.testing.assert_allclose(np.asarray(out), np.asarray(ref),
                                   rtol=1e-4, atol=2e-5)

    # Case 1: cubic volume -> two halo'd D tiles of 8; exercises the dynamic
    # interior fori_loop, both guarded halo DMAs and the MXU H/W passes.
    _check(jax.random.normal(k0, (2, 1, 16, 16, 16), dtype=jnp.float32),
           (2, 1, 16, 16, 16))

    # Case 2: lane-dense W (=128), four D tiles of 6 -> all-boundary-slice path.
    _check(jax.random.normal(k1, (1, 1, 24, 8, 128), dtype=jnp.float32),
           (1, 1, 24, 8, 128))

    # Case 3: D with no divisor in range -> exercises the zero-pad-D fallback.
    _check(jax.random.normal(k2, (1, 1, 13, 16, 16), dtype=jnp.float32),
           (1, 1, 13, 16, 16))

    # Case 4: batch-only grid (single D tile) -> zeroed-halo path, no halo DMA.
    _check(jax.random.normal(k3, (4, 1, 8, 8, 16), dtype=jnp.float32),
           (4, 1, 8, 8, 16))

    print("KERNEL_OK")
</pallas_src>

<mosaic_0001>
module attributes {stable_mosaic.version = 11 : i64} {
  func.func @kernel(%arg0: i32, %arg1: i32, %arg2: memref<16x16xf32, #tpu.memory_space<vmem>>, %arg3: memref<16x16xf32, #tpu.memory_space<vmem>>, %arg4: memref<1x8x16x16xf32, #tpu.memory_space<vmem>>, %arg5: memref<2x16x16x16xf32, #tpu.memory_space<any>>, %arg6: memref<1x8x16x16xf32, #tpu.memory_space<vmem>>, %arg7: memref<3x16x16xf32, #tpu.memory_space<vmem>>, %arg8: memref<3x16x16xf32, #tpu.memory_space<vmem>>, %arg9: memref<2x!tpu.dma_semaphore, #tpu.memory_space<semaphore_mem>>) attributes {dimension_semantics = [#tpu.dimension_semantics<parallel>, #tpu.dimension_semantics<parallel>], iteration_bounds = array<i64: 2, 2>, scalar_prefetch = 0 : i64, scratch_operands = 3 : i64, tpu.core_type = #tpu.core_type<tc>, window_params = [{pipeline_mode = #tpu.pipeline_mode<synchronous>, transform_indices = @transform_0, window_bounds = array<i64: 16, 16>}, {pipeline_mode = #tpu.pipeline_mode<synchronous>, transform_indices = @transform_1, window_bounds = array<i64: 16, 16>}, {transform_indices = @transform_2, window_bounds = array<i64: 1, 8, 16, 16>}, {}, {transform_indices = @transform_4, window_bounds = array<i64: 1, 8, 16, 16>}]} {
    %c0_i32 = arith.constant 0 : i32
    %0 = arith.cmpi sgt, %arg1, %c0_i32 : i32
    %1 = arith.extui %0 : i1 to i32
    %c0_i32_0 = arith.constant 0 : i32
    %2 = arith.cmpi ne, %1, %c0_i32_0 : i32
    scf.if %2 {
      %c8_i32 = arith.constant 8 : i32
      %388 = arith.muli %arg1, %c8_i32 : i32
      %c3_i32_357 = arith.constant 3 : i32
      %389 = arith.subi %388, %c3_i32_357 : i32
      %c0_i32_358 = arith.constant 0 : i32
      %c0_i32_359 = arith.constant 0 : i32
      %c0_i32_360 = arith.constant 0 : i32
      %390 = tpu.memref_slice %arg5[%arg0, %389, %c0_i32_359, %c0_i32_360] : memref<2x16x16x16xf32, #tpu.memory_space<any>> -> memref<1x3x16x16xf32, #tpu.memory_space<any>>
      %391 = tpu.memref_squeeze %390 : memref<1x3x16x16xf32, #tpu.memory_space<any>> -> memref<3x16x16xf32, #tpu.memory_space<any>>
      %392 = tpu.memref_slice %arg9[%c0_i32_358] : memref<2x!tpu.dma_semaphore, #tpu.memory_space<semaphore_mem>> -> memref<1x!tpu.dma_semaphore, #tpu.memory_space<semaphore_mem>>
      %393 = tpu.memref_squeeze %392 : memref<1x!tpu.dma_semaphore, #tpu.memory_space<semaphore_mem>> -> memref<!tpu.dma_semaphore, #tpu.memory_space<semaphore_mem>>
      tpu.enqueue_dma source(%391 : memref<3x16x16xf32, #tpu.memory_space<any>>) target(%arg7 : memref<3x16x16xf32, #tpu.memory_space<vmem>>) target_semaphore(%393 : memref<!tpu.dma_semaphore, #tpu.memory_space<semaphore_mem>>)
    } else {
    }
    %c1_i32 = arith.constant 1 : i32
    %3 = arith.cmpi slt, %arg1, %c1_i32 : i32
    %4 = arith.extui %3 : i1 to i32
    %c0_i32_1 = arith.constant 0 : i32
    %5 = arith.cmpi ne, %4, %c0_i32_1 : i32
    scf.if %5 {
      %c8_i32 = arith.constant 8 : i32
      %388 = arith.muli %arg1, %c8_i32 : i32
      %c8_i32_357 = arith.constant 8 : i32
      %389 = arith.addi %388, %c8_i32_357 : i32
      %c1_i32_358 = arith.constant 1 : i32
      %c0_i32_359 = arith.constant 0 : i32
      %c0_i32_360 = arith.constant 0 : i32
      %390 = tpu.memref_slice %arg5[%arg0, %389, %c0_i32_359, %c0_i32_360] : memref<2x16x16x16xf32, #tpu.memory_space<any>> -> memref<1x3x16x16xf32, #tpu.memory_space<any>>
      %391 = tpu.memref_squeeze %390 : memref<1x3x16x16xf32, #tpu.memory_space<any>> -> memref<3x16x16xf32, #tpu.memory_space<any>>
      %392 = tpu.memref_slice %arg9[%c1_i32_358] : memref<2x!tpu.dma_semaphore, #tpu.memory_space<semaphore_mem>> -> memref<1x!tpu.dma_semaphore, #tpu.memory_space<semaphore_mem>>
      %393 = tpu.memref_squeeze %392 : memref<1x!tpu.dma_semaphore, #tpu.memory_space<semaphore_mem>> -> memref<!tpu.dma_semaphore, #tpu.memory_space<semaphore_mem>>
      tpu.enqueue_dma source(%391 : memref<3x16x16xf32, #tpu.memory_space<any>>) target(%arg8 : memref<3x16x16xf32, #tpu.memory_space<vmem>>) target_semaphore(%393 : memref<!tpu.dma_semaphore, #tpu.memory_space<semaphore_mem>>)
    } else {
    }
    %c0_i32_2 = arith.constant 0 : i32
    %6 = arith.cmpi eq, %arg1, %c0_i32_2 : i32
    %7 = arith.extui %6 : i1 to i32
    %c0_i32_3 = arith.constant 0 : i32
    %8 = arith.cmpi ne, %7, %c0_i32_3 : i32
    scf.if %8 {
      %cst_357 = arith.constant 0.000000e+00 : f32
      %388 = vector.broadcast %cst_357 : f32 to vector<3x16x16xf32>
      %c0_358 = arith.constant 0 : index
      %c0_359 = arith.constant 0 : index
      %c0_360 = arith.constant 0 : index
      %389 = vector.load %arg7[%c0_358, %c0_359, %c0_360] : memref<3x16x16xf32, #tpu.memory_space<vmem>>, vector<3x16x16xf32>
      tpu.vector_store %arg7[%c0_358, %c0_359, %c0_360], %388 {strides = array<i32>} : memref<3x16x16xf32, #tpu.memory_space<vmem>>, vector<3x16x16xf32>,
    } else {
    }
    %c1_i32_4 = arith.constant 1 : i32
    %9 = arith.cmpi eq, %arg1, %c1_i32_4 : i32
    %10 = arith.extui %9 : i1 to i32
    %c0_i32_5 = arith.constant 0 : i32
    %11 = arith.cmpi ne, %10, %c0_i32_5 : i32
    scf.if %11 {
      %cst_357 = arith.constant 0.000000e+00 : f32
      %388 = vector.broadcast %cst_357 : f32 to vector<3x16x16xf32>
      %c0_358 = arith.constant 0 : index
      %c0_359 = arith.constant 0 : index
      %c0_360 = arith.constant 0 : index
      %389 = vector.load %arg8[%c0_358, %c0_359, %c0_360] : memref<3x16x16xf32, #tpu.memory_space<vmem>>, vector<3x16x16xf32>
      tpu.vector_store %arg8[%c0_358, %c0_359, %c0_360], %388 {strides = array<i32>} : memref<3x16x16xf32, #tpu.memory_space<vmem>>, vector<3x16x16xf32>,
    } else {
    }
    %c3_i32 = arith.constant 3 : i32
    %c3_i32_6 = arith.constant 3 : i32
    %12 = arith.subi %c3_i32, %c3_i32_6 : i32
    %c0 = arith.constant 0 : index
    %13 = arith.index_cast %12 : i32 to index
    %c0_7 = arith.constant 0 : index
    %c0_8 = arith.constant 0 : index
    %14 = vector.load %arg4[%c0, %13, %c0_7, %c0_8] : memref<1x8x16x16xf32, #tpu.memory_space<vmem>>, vector<1x1x16x16xf32>
    %15 = vector.shape_cast %14 : vector<1x1x16x16xf32> to vector<16x16xf32>
    %cst = arith.constant 0.00456569204 : f32
    %16 = vector.broadcast %cst : f32 to vector<16x16xf32>
    %17 = arith.mulf %16, %15 : vector<16x16xf32>
    %c3_i32_9 = arith.constant 3 : i32
    %18 = arith.subi %c3_i32, %c3_i32_9 : i32
    %c1_i32_10 = arith.constant 1 : i32
    %19 = arith.addi %18, %c1_i32_10 : i32
    %c0_11 = arith.constant 0 : index
    %20 = arith.index_cast %19 : i32 to index
    %c0_12 = arith.constant 0 : index
    %c0_13 = arith.constant 0 : index
    %21 = vector.load %arg4[%c0_11, %20, %c0_12, %c0_13] : memref<1x8x16x16xf32, #tpu.memory_space<vmem>>, vector<1x1x16x16xf32>
    %22 = vector.shape_cast %21 : vector<1x1x16x16xf32> to vector<16x16xf32>
    %cst_14 = arith.constant 0.0539911278 : f32
    %23 = vector.broadcast %cst_14 : f32 to vector<16x16xf32>
    %24 = arith.mulf %23, %22 : vector<16x16xf32>
    %25 = arith.addf %17, %24 : vector<16x16xf32>
    %c3_i32_15 = arith.constant 3 : i32
    %26 = arith.subi %c3_i32, %c3_i32_15 : i32
    %c2_i32 = arith.constant 2 : i32
    %27 = arith.addi %26, %c2_i32 : i32
    %c0_16 = arith.constant 0 : index
    %28 = arith.index_cast %27 : i32 to index
    %c0_17 = arith.constant 0 : index
    %c0_18 = arith.constant 0 : index
    %29 = vector.load %arg4[%c0_16, %28, %c0_17, %c0_18] : memref<1x8x16x16xf32, #tpu.memory_space<vmem>>, vector<1x1x16x16xf32>
    %30 = vector.shape_cast %29 : vector<1x1x16x16xf32> to vector<16x16xf32>
    %cst_19 = arith.constant 0.241971448 : f32
    %31 = vector.broadcast %cst_19 : f32 to vector<16x16xf32>
    %32 = arith.mulf %31, %30 : vector<16x16xf32>
    %33 = arith.addf %25, %32 : vector<16x16xf32>
    %c3_i32_20 = arith.constant 3 : i32
    %34 = arith.subi %c3_i32, %c3_i32_20 : i32
    %c3_i32_21 = arith.constant 3 : i32
    %35 = arith.addi %34, %c3_i32_21 : i32
    %c0_22 = arith.constant 0 : index
    %36 = arith.index_cast %35 : i32 to index
    %c0_23 = arith.constant 0 : index
    %c0_24 = arith.constant 0 : index
    %37 = vector.load %arg4[%c0_22, %36, %c0_23, %c0_24] : memref<1x8x16x16xf32, #tpu.memory_space<vmem>>, vector<1x1x16x16xf32>
    %38 = vector.shape_cast %37 : vector<1x1x16x16xf32> to vector<16x16xf32>
    %cst_25 = arith.constant 0.398943484 : f32
    %39 = vector.broadcast %cst_25 : f32 to vector<16x16xf32>
    %40 = arith.mulf %39, %38 : vector<16x16xf32>
    %41 = arith.addf %33, %40 : vector<16x16xf32>
    %c3_i32_26 = arith.constant 3 : i32
    %42 = arith.subi %c3_i32, %c3_i32_26 : i32
    %c4_i32 = arith.constant 4 : i32
    %43 = arith.addi %42, %c4_i32 : i32
    %c0_27 = arith.constant 0 : index
    %44 = arith.index_cast %43 : i32 to index
    %c0_28 = arith.constant 0 : index
    %c0_29 = arith.constant 0 : index
    %45 = vector.load %arg4[%c0_27, %44, %c0_28, %c0_29] : memref<1x8x16x16xf32, #tpu.memory_space<vmem>>, vector<1x1x16x16xf32>
    %46 = vector.shape_cast %45 : vector<1x1x16x16xf32> to vector<16x16xf32>
    %cst_30 = arith.constant 0.241971448 : f32
    %47 = vector.broadcast %cst_30 : f32 to vector<16x16xf32>
    %48 = arith.mulf %47, %46 : vector<16x16xf32>
    %49 = arith.addf %41, %48 : vector<16x16xf32>
    %c3_i32_31 = arith.constant 3 : i32
    %50 = arith.subi %c3_i32, %c3_i32_31 : i32
    %c5_i32 = arith.constant 5 : i32
    %51 = arith.addi %50, %c5_i32 : i32
    %c0_32 = arith.constant 0 : index
    %52 = arith.index_cast %51 : i32 to index
    %c0_33 = arith.constant 0 : index
    %c0_34 = arith.constant 0 : index
    %53 = vector.load %arg4[%c0_32, %52, %c0_33, %c0_34] : memref<1x8x16x16xf32, #tpu.memory_space<vmem>>, vector<1x1x16x16xf32>
    %54 = vector.shape_cast %53 : vector<1x1x16x16xf32> to vector<16x16xf32>
    %cst_35 = arith.constant 0.0539911278 : f32
    %55 = vector.broadcast %cst_35 : f32 to vector<16x16xf32>
    %56 = arith.mulf %55, %54 : vector<16x16xf32>
    %57 = arith.addf %49, %56 : vector<16x16xf32>
    %c3_i32_36 = arith.constant 3 : i32
    %58 = arith.subi %c3_i32, %c3_i32_36 : i32
    %c6_i32 = arith.constant 6 : i32
    %59 = arith.addi %58, %c6_i32 : i32
    %c0_37 = arith.constant 0 : index
    %60 = arith.index_cast %59 : i32 to index
    %c0_38 = arith.constant 0 : index
    %c0_39 = arith.constant 0 : index
    %61 = vector.load %arg4[%c0_37, %60, %c0_38, %c0_39] : memref<1x8x16x16xf32, #tpu.memory_space<vmem>>, vector<1x1x16x16xf32>
    %62 = vector.shape_cast %61 : vector<1x1x16x16xf32> to vector<16x16xf32>
    %cst_40 = arith.constant 0.00456569204 : f32
    %63 = vector.broadcast %cst_40 : f32 to vector<16x16xf32>
    %64 = arith.mulf %63, %62 : vector<16x16xf32>
    %65 = arith.addf %57, %64 : vector<16x16xf32>
    %c0_41 = arith.constant 0 : index
    %c0_42 = arith.constant 0 : index
    %66 = vector.load %arg2[%c0_41, %c0_42] : memref<16x16xf32, #tpu.memory_space<vmem>>, vector<16x16xf32>
    %cst_43 = arith.constant dense<0.000000e+00> : vector<16x16xf32>
    %67 = tpu.matmul %66, %65, %cst_43 {dimension_numbers = #tpu.dot_dimension_numbers<[1], [0], [0], [1], [0, 0, 1, 1], [], []>} : vector<16x16xf32>, vector<16x16xf32>, vector<16x16xf32> -> vector<16x16xf32>
    %c0_44 = arith.constant 0 : index
    %c0_45 = arith.constant 0 : index
    %68 = vector.load %arg3[%c0_44, %c0_45] : memref<16x16xf32, #tpu.memory_space<vmem>>, vector<16x16xf32>
    %cst_46 = arith.constant dense<0.000000e+00> : vector<16x16xf32>
    %69 = tpu.matmul %67, %68, %cst_46 {dimension_numbers = #tpu.dot_dimension_numbers<[1], [0], [0], [1], [0, 0, 1, 1], [], []>} : vector<16x16xf32>, vector<16x16xf32>, vector<16x16xf32> -> vector<16x16xf32>
    %c0_47 = arith.constant 0 : index
    %70 = arith.index_cast %c3_i32 : i32 to index
    %c0_48 = arith.constant 0 : index
    %c0_49 = arith.constant 0 : index
    %71 = vector.load %arg6[%c0_47, %70, %c0_48, %c0_49] : memref<1x8x16x16xf32, #tpu.memory_space<vmem>>, vector<1x1x16x16xf32>
    %72 = vector.shape_cast %71 : vector<1x1x16x16xf32> to vector<16x16xf32>
    %73 = vector.shape_cast %69 : vector<16x16xf32> to vector<1x1x16x16xf32>
    tpu.vector_store %arg6[%c0_47, %70, %c0_48, %c0_49], %73 {strides = array<i32>} : memref<1x8x16x16xf32, #tpu.memory_space<vmem>>, vector<1x1x16x16xf32>,
    %c4_i32_50 = arith.constant 4 : i32
    %c3_i32_51 = arith.constant 3 : i32
    %74 = arith.subi %c4_i32_50, %c3_i32_51 : i32
    %c0_52 = arith.constant 0 : index
    %75 = arith.index_cast %74 : i32 to index
    %c0_53 = arith.constant 0 : index
    %c0_54 = arith.constant 0 : index
    %76 = vector.load %arg4[%c0_52, %75, %c0_53, %c0_54] : memref<1x8x16x16xf32, #tpu.memory_space<vmem>>, vector<1x1x16x16xf32>
    %77 = vector.shape_cast %76 : vector<1x1x16x16xf32> to vector<16x16xf32>
    %cst_55 = arith.constant 0.00456569204 : f32
    %78 = vector.broadcast %cst_55 : f32 to vector<16x16xf32>
    %79 = arith.mulf %78, %77 : vector<16x16xf32>
    %c3_i32_56 = arith.constant 3 : i32
    %80 = arith.subi %c4_i32_50, %c3_i32_56 : i32
    %c1_i32_57 = arith.constant 1 : i32
    %81 = arith.addi %80, %c1_i32_57 : i32
    %c0_58 = arith.constant 0 : index
    %82 = arith.index_cast %81 : i32 to index
    %c0_59 = arith.constant 0 : index
    %c0_60 = arith.constant 0 : index
    %83 = vector.load %arg4[%c0_58, %82, %c0_59, %c0_60] : memref<1x8x16x16xf32, #tpu.memory_space<vmem>>, vector<1x1x16x16xf32>
    %84 = vector.shape_cast %83 : vector<1x1x16x16xf32> to vector<16x16xf32>
    %cst_61 = arith.constant 0.0539911278 : f32
    %85 = vector.broadcast %cst_61 : f32 to vector<16x16xf32>
    %86 = arith.mulf %85, %84 : vector<16x16xf32>
    %87 = arith.addf %79, %86 : vector<16x16xf32>
    %c3_i32_62 = arith.constant 3 : i32
    %88 = arith.subi %c4_i32_50, %c3_i32_62 : i32
    %c2_i32_63 = arith.constant 2 : i32
    %89 = arith.addi %88, %c2_i32_63 : i32
    %c0_64 = arith.constant 0 : index
    %90 = arith.index_cast %89 : i32 to index
    %c0_65 = arith.constant 0 : index
    %c0_66 = arith.constant 0 : index
    %91 = vector.load %arg4[%c0_64, %90, %c0_65, %c0_66] : memref<1x8x16x16xf32, #tpu.memory_space<vmem>>, vector<1x1x16x16xf32>
    %92 = vector.shape_cast %91 : vector<1x1x16x16xf32> to vector<16x16xf32>
    %cst_67 = arith.constant 0.241971448 : f32
    %93 = vector.broadcast %cst_67 : f32 to vector<16x16xf32>
    %94 = arith.mulf %93, %92 : vector<16x16xf32>
    %95 = arith.addf %87, %94 : vector<16x16xf32>
    %c3_i32_68 = arith.constant 3 : i32
    %96 = arith.subi %c4_i32_50, %c3_i32_68 : i32
    %c3_i32_69 = arith.constant 3 : i32
    %97 = arith.addi %96, %c3_i32_69 : i32
    %c0_70 = arith.constant 0 : index
    %98 = arith.index_cast %97 : i32 to index
    %c0_71 = arith.constant 0 : index
    %c0_72 = arith.constant 0 : index
    %99 = vector.load %arg4[%c0_70, %98, %c0_71, %c0_72] : memref<1x8x16x16xf32, #tpu.memory_space<vmem>>, vector<1x1x16x16xf32>
    %100 = vector.shape_cast %99 : vector<1x1x16x16xf32> to vector<16x16xf32>
    %cst_73 = arith.constant 0.398943484 : f32
    %101 = vector.broadcast %cst_73 : f32 to vector<16x16xf32>
    %102 = arith.mulf %101, %100 : vector<16x16xf32>
    %103 = arith.addf %95, %102 : vector<16x16xf32>
    %c3_i32_74 = arith.constant 3 : i32
    %104 = arith.subi %c4_i32_50, %c3_i32_74 : i32
    %c4_i32_75 = arith.constant 4 : i32
    %105 = arith.addi %104, %c4_i32_75 : i32
    %c0_76 = arith.constant 0 : index
    %106 = arith.index_cast %105 : i32 to index
    %c0_77 = arith.constant 0 : index
    %c0_78 = arith.constant 0 : index
    %107 = vector.load %arg4[%c0_76, %106, %c0_77, %c0_78] : memref<1x8x16x16xf32, #tpu.memory_space<vmem>>, vector<1x1x16x16xf32>
    %108 = vector.shape_cast %107 : vector<1x1x16x16xf32> to vector<16x16xf32>
    %cst_79 = arith.constant 0.241971448 : f32
    %109 = vector.broadcast %cst_79 : f32 to vector<16x16xf32>
    %110 = arith.mulf %109, %108 : vector<16x16xf32>
    %111 = arith.addf %103, %110 : vector<16x16xf32>
    %c3_i32_80 = arith.constant 3 : i32
    %112 = arith.subi %c4_i32_50, %c3_i32_80 : i32
    %c5_i32_81 = arith.constant 5 : i32
    %113 = arith.addi %112, %c5_i32_81 : i32
    %c0_82 = arith.constant 0 : index
    %114 = arith.index_cast %113 : i32 to index
    %c0_83 = arith.constant 0 : index
    %c0_84 = arith.constant 0 : index
    %115 = vector.load %arg4[%c0_82, %114, %c0_83, %c0_84] : memref<1x8x16x16xf32, #tpu.memory_space<vmem>>, vector<1x1x16x16xf32>
    %116 = vector.shape_cast %115 : vector<1x1x16x16xf32> to vector<16x16xf32>
    %cst_85 = arith.constant 0.0539911278 : f32
    %117 = vector.broadcast %cst_85 : f32 to vector<16x16xf32>
    %118 = arith.mulf %117, %116 : vector<16x16xf32>
    %119 = arith.addf %111, %118 : vector<16x16xf32>
    %c3_i32_86 = arith.constant 3 : i32
    %120 = arith.subi %c4_i32_50, %c3_i32_86 : i32
    %c6_i32_87 = arith.constant 6 : i32
    %121 = arith.addi %120, %c6_i32_87 : i32
    %c0_88 = arith.constant 0 : index
    %122 = arith.index_cast %121 : i32 to index
    %c0_89 = arith.constant 0 : index
    %c0_90 = arith.constant 0 : index
    %123 = vector.load %arg4[%c0_88, %122, %c0_89, %c0_90] : memref<1x8x16x16xf32, #tpu.memory_space<vmem>>, vector<1x1x16x16xf32>
    %124 = vector.shape_cast %123 : vector<1x1x16x16xf32> to vector<16x16xf32>
    %cst_91 = arith.constant 0.00456569204 : f32
    %125 = vector.broadcast %cst_91 : f32 to vector<16x16xf32>
    %126 = arith.mulf %125, %124 : vector<16x16xf32>
    %127 = arith.addf %119, %126 : vector<16x16xf32>
    %c0_92 = arith.constant 0 : index
    %c0_93 = arith.constant 0 : index
    %128 = vector.load %arg2[%c0_92, %c0_93] : memref<16x16xf32, #tpu.memory_space<vmem>>, vector<16x16xf32>
    %cst_94 = arith.constant dense<0.000000e+00> : vector<16x16xf32>
    %129 = tpu.matmul %128, %127, %cst_94 {dimension_numbers = #tpu.dot_dimension_numbers<[1], [0], [0], [1], [0, 0, 1, 1], [], []>} : vector<16x16xf32>, vector<16x16xf32>, vector<16x16xf32> -> vector<16x16xf32>
    %c0_95 = arith.constant 0 : index
    %c0_96 = arith.constant 0 : index
    %130 = vector.load %arg3[%c0_95, %c0_96] : memref<16x16xf32, #tpu.memory_space<vmem>>, vector<16x16xf32>
    %cst_97 = arith.constant dense<0.000000e+00> : vector<16x16xf32>
    %131 = tpu.matmul %129, %130, %cst_97 {dimension_numbers = #tpu.dot_dimension_numbers<[1], [0], [0], [1], [0, 0, 1, 1], [], []>} : vector<16x16xf32>, vector<16x16xf32>, vector<16x16xf32> -> vector<16x16xf32>
    %c0_98 = arith.constant 0 : index
    %132 = arith.index_cast %c4_i32_50 : i32 to index
    %c0_99 = arith.constant 0 : index
    %c0_100 = arith.constant 0 : index
    %133 = vector.load %arg6[%c0_98, %132, %c0_99, %c0_100] : memref<1x8x16x16xf32, #tpu.memory_space<vmem>>, vector<1x1x16x16xf32>
    %134 = vector.shape_cast %133 : vector<1x1x16x16xf32> to vector<16x16xf32>
    %135 = vector.shape_cast %131 : vector<16x16xf32> to vector<1x1x16x16xf32>
    tpu.vector_store %arg6[%c0_98, %132, %c0_99, %c0_100], %135 {strides = array<i32>} : memref<1x8x16x16xf32, #tpu.memory_space<vmem>>, vector<1x1x16x16xf32>,
    %c2_i32_101 = arith.constant 2 : i32
    %c0_i32_102 = arith.constant 0 : i32
    %136 = arith.cmpi sgt, %arg1, %c0_i32_102 : i32
    %137 = arith.extui %136 : i1 to i32
    %c0_i32_103 = arith.constant 0 : i32
    %138 = arith.cmpi ne, %137, %c0_i32_103 : i32
    scf.if %138 {
      %c8_i32 = arith.constant 8 : i32
      %388 = arith.muli %arg1, %c8_i32 : i32
      %c3_i32_357 = arith.constant 3 : i32
      %389 = arith.subi %388, %c3_i32_357 : i32
      %c0_i32_358 = arith.constant 0 : i32
      %c0_i32_359 = arith.constant 0 : i32
      %c0_i32_360 = arith.constant 0 : i32
      %390 = tpu.memref_slice %arg5[%arg0, %389, %c0_i32_359, %c0_i32_360] : memref<2x16x16x16xf32, #tpu.memory_space<any>> -> memref<1x3x16x16xf32, #tpu.memory_space<any>>
      %391 = tpu.memref_squeeze %390 : memref<1x3x16x16xf32, #tpu.memory_space<any>> -> memref<3x16x16xf32, #tpu.memory_space<any>>
      %392 = tpu.memref_slice %arg9[%c0_i32_358] : memref<2x!tpu.dma_semaphore, #tpu.memory_space<semaphore_mem>> -> memref<1x!tpu.dma_semaphore, #tpu.memory_space<semaphore_mem>>
      %393 = tpu.memref_squeeze %392 : memref<1x!tpu.dma_semaphore, #tpu.memory_space<semaphore_mem>> -> memref<!tpu.dma_semaphore, #tpu.memory_space<semaphore_mem>>
      tpu.wait_dma2 semaphore(%393 : memref<!tpu.dma_semaphore, #tpu.memory_space<semaphore_mem>>) src(%391 : memref<3x16x16xf32, #tpu.memory_space<any>>) dst(%arg7 : memref<3x16x16xf32, #tpu.memory_space<vmem>>)
    } else {
    }
    %c1_i32_104 = arith.constant 1 : i32
    %139 = arith.cmpi slt, %arg1, %c1_i32_104 : i32
    %140 = arith.extui %139 : i1 to i32
    %c0_i32_105 = arith.constant 0 : i32
    %141 = arith.cmpi ne, %140, %c0_i32_105 : i32
    scf.if %141 {
      %c8_i32 = arith.constant 8 : i32
      %388 = arith.muli %arg1, %c8_i32 : i32
      %c8_i32_357 = arith.constant 8 : i32
      %389 = arith.addi %388, %c8_i32_357 : i32
      %c1_i32_358 = arith.constant 1 : i32
      %c0_i32_359 = arith.constant 0 : i32
      %c0_i32_360 = arith.constant 0 : i32
      %390 = tpu.memref_slice %arg5[%arg0, %389, %c0_i32_359, %c0_i32_360] : memref<2x16x16x16xf32, #tpu.memory_space<any>> -> memref<1x3x16x16xf32, #tpu.memory_space<any>>
      %391 = tpu.memref_squeeze %390 : memref<1x3x16x16xf32, #tpu.memory_space<any>> -> memref<3x16x16xf32, #tpu.memory_space<any>>
      %392 = tpu.memref_slice %arg9[%c1_i32_358] : memref<2x!tpu.dma_semaphore, #tpu.memory_space<semaphore_mem>> -> memref<1x!tpu.dma_semaphore, #tpu.memory_space<semaphore_mem>>
      %393 = tpu.memref_squeeze %392 : memref<1x!tpu.dma_semaphore, #tpu.memory_space<semaphore_mem>> -> memref<!tpu.dma_semaphore, #tpu.memory_space<semaphore_mem>>
      tpu.wait_dma2 semaphore(%393 : memref<!tpu.dma_semaphore, #tpu.memory_space<semaphore_mem>>) src(%391 : memref<3x16x16xf32, #tpu.memory_space<any>>) dst(%arg8 : memref<3x16x16xf32, #tpu.memory_space<vmem>>)
    } else {
    }
    %c0_106 = arith.constant 0 : index
    %c0_107 = arith.constant 0 : index
    %c0_108 = arith.constant 0 : index
    %142 = vector.load %arg7[%c0_106, %c0_107, %c0_108] : memref<3x16x16xf32, #tpu.memory_space<vmem>>, vector<1x16x16xf32>
    %143 = vector.shape_cast %142 : vector<1x16x16xf32> to vector<16x16xf32>
    %cst_109 = arith.constant 0.00456569204 : f32
    %144 = vector.broadcast %cst_109 : f32 to vector<16x16xf32>
    %145 = arith.mulf %144, %143 : vector<16x16xf32>
    %c1 = arith.constant 1 : index
    %c0_110 = arith.constant 0 : index
    %c0_111 = arith.constant 0 : index
    %146 = vector.load %arg7[%c1, %c0_110, %c0_111] : memref<3x16x16xf32, #tpu.memory_space<vmem>>, vector<1x16x16xf32>
    %147 = vector.shape_cast %146 : vector<1x16x16xf32> to vector<16x16xf32>
    %cst_112 = arith.constant 0.0539911278 : f32
    %148 = vector.broadcast %cst_112 : f32 to vector<16x16xf32>
    %149 = arith.mulf %148, %147 : vector<16x16xf32>
    %150 = arith.addf %145, %149 : vector<16x16xf32>
    %c2 = arith.constant 2 : index
    %c0_113 = arith.constant 0 : index
    %c0_114 = arith.constant 0 : index
    %151 = vector.load %arg7[%c2, %c0_113, %c0_114] : memref<3x16x16xf32, #tpu.memory_space<vmem>>, vector<1x16x16xf32>
    %152 = vector.shape_cast %151 : vector<1x16x16xf32> to vector<16x16xf32>
    %cst_115 = arith.constant 0.241971448 : f32
    %153 = vector.broadcast %cst_115 : f32 to vector<16x16xf32>
    %154 = arith.mulf %153, %152 : vector<16x16xf32>
    %155 = arith.addf %150, %154 : vector<16x16xf32>
    %c0_116 = arith.constant 0 : index
    %c0_117 = arith.constant 0 : index
    %c0_118 = arith.constant 0 : index
    %c0_119 = arith.constant 0 : index
    %156 = vector.load %arg4[%c0_116, %c0_117, %c0_118, %c0_119] : memref<1x8x16x16xf32, #tpu.memory_space<vmem>>, vector<1x1x16x16xf32>
    %157 = vector.shape_cast %156 : vector<1x1x16x16xf32> to vector<16x16xf32>
    %cst_120 = arith.constant 0.398943484 : f32
    %158 = vector.broadcast %cst_120 : f32 to vector<16x16xf32>
    %159 = arith.mulf %158, %157 : vector<16x16xf32>
    %160 = arith.addf %155, %159 : vector<16x16xf32>
    %c0_121 = arith.constant 0 : index
    %c1_122 = arith.constant 1 : index
    %c0_123 = arith.constant 0 : index
    %c0_124 = arith.constant 0 : index
    %161 = vector.load %arg4[%c0_121, %c1_122, %c0_123, %c0_124] : memref<1x8x16x16xf32, #tpu.memory_space<vmem>>, vector<1x1x16x16xf32>
    %162 = vector.shape_cast %161 : vector<1x1x16x16xf32> to vector<16x16xf32>
    %cst_125 = arith.constant 0.241971448 : f32
    %163 = vector.broadcast %cst_125 : f32 to vector<16x16xf32>
    %164 = arith.mulf %163, %162 : vector<16x16xf32>
    %165 = arith.addf %160, %164 : vector<16x16xf32>
    %c0_126 = arith.constant 0 : index
    %c2_127 = arith.constant 2 : index
    %c0_128 = arith.constant 0 : index
    %c0_129 = arith.constant 0 : index
    %166 = vector.load %arg4[%c0_126, %c2_127, %c0_128, %c0_129] : memref<1x8x16x16xf32, #tpu.memory_space<vmem>>, vector<1x1x16x16xf32>
    %167 = vector.shape_cast %166 : vector<1x1x16x16xf32> to vector<16x16xf32>
    %cst_130 = arith.constant 0.0539911278 : f32
    %168 = vector.broadcast %cst_130 : f32 to vector<16x16xf32>
    %169 = arith.mulf %168, %167 : vector<16x16xf32>
    %170 = arith.addf %165, %169 : vector<16x16xf32>
    %c0_131 = arith.constant 0 : index
    %c3 = arith.constant 3 : index
    %c0_132 = arith.constant 0 : index
    %c0_133 = arith.constant 0 : index
    %171 = vector.load %arg4[%c0_131, %c3, %c0_132, %c0_133] : memref<1x8x16x16xf32, #tpu.memory_space<vmem>>, vector<1x1x16x16xf32>
    %172 = vector.shape_cast %171 : vector<1x1x16x16xf32> to vector<16x16xf32>
    %cst_134 = arith.constant 0.00456569204 : f32
    %173 = vector.broadcast %cst_134 : f32 to vector<16x16xf32>
    %174 = arith.mulf %173, %172 : vector<16x16xf32>
    %175 = arith.addf %170, %174 : vector<16x16xf32>
    %c0_135 = arith.constant 0 : index
    %c0_136 = arith.constant 0 : index
    %176 = vector.load %arg2[%c0_135, %c0_136] : memref<16x16xf32, #tpu.memory_space<vmem>>, vector<16x16xf32>
    %cst_137 = arith.constant dense<0.000000e+00> : vector<16x16xf32>
    %177 = tpu.matmul %176, %175, %cst_137 {dimension_numbers = #tpu.dot_dimension_numbers<[1], [0], [0], [1], [0, 0, 1, 1], [], []>} : vector<16x16xf32>, vector<16x16xf32>, vector<16x16xf32> -> vector<16x16xf32>
    %c0_138 = arith.constant 0 : index
    %c0_139 = arith.constant 0 : index
    %178 = vector.load %arg3[%c0_138, %c0_139] : memref<16x16xf32, #tpu.memory_space<vmem>>, vector<16x16xf32>
    %cst_140 = arith.constant dense<0.000000e+00> : vector<16x16xf32>
    %179 = tpu.matmul %177, %178, %cst_140 {dimension_numbers = #tpu.dot_dimension_numbers<[1], [0], [0], [1], [0, 0, 1, 1], [], []>} : vector<16x16xf32>, vector<16x16xf32>, vector<16x16xf32> -> vector<16x16xf32>
    %c0_141 = arith.constant 0 : index
    %c0_142 = arith.constant 0 : index
    %c0_143 = arith.constant 0 : index
    %c0_144 = arith.constant 0 : index
    %180 = vector.load %arg6[%c0_141, %c0_142, %c0_143, %c0_144] : memref<1x8x16x16xf32, #tpu.memory_space<vmem>>, vector<1x1x16x16xf32>
    %181 = vector.shape_cast %180 : vector<1x1x16x16xf32> to vector<16x16xf32>
    %182 = vector.shape_cast %179 : vector<16x16xf32> to vector<1x1x16x16xf32>
    tpu.vector_store %arg6[%c0_141, %c0_142, %c0_143, %c0_144], %182 {strides = array<i32>} : memref<1x8x16x16xf32, #tpu.memory_space<vmem>>, vector<1x1x16x16xf32>,
    %c1_145 = arith.constant 1 : index
    %c0_146 = arith.constant 0 : index
    %c0_147 = arith.constant 0 : index
    %183 = vector.load %arg7[%c1_145, %c0_146, %c0_147] : memref<3x16x16xf32, #tpu.memory_space<vmem>>, vector<1x16x16xf32>
    %184 = vector.shape_cast %183 : vector<1x16x16xf32> to vector<16x16xf32>
    %cst_148 = arith.constant 0.00456569204 : f32
    %185 = vector.broadcast %cst_148 : f32 to vector<16x16xf32>
    %186 = arith.mulf %185, %184 : vector<16x16xf32>
    %c2_149 = arith.constant 2 : index
    %c0_150 = arith.constant 0 : index
    %c0_151 = arith.constant 0 : index
    %187 = vector.load %arg7[%c2_149, %c0_150, %c0_151] : memref<3x16x16xf32, #tpu.memory_space<vmem>>, vector<1x16x16xf32>
    %188 = vector.shape_cast %187 : vector<1x16x16xf32> to vector<16x16xf32>
    %cst_152 = arith.constant 0.0539911278 : f32
    %189 = vector.broadcast %cst_152 : f32 to vector<16x16xf32>
    %190 = arith.mulf %189, %188 : vector<16x16xf32>
    %191 = arith.addf %186, %190 : vector<16x16xf32>
    %c0_153 = arith.constant 0 : index
    %c0_154 = arith.constant 0 : index
    %c0_155 = arith.constant 0 : index
    %c0_156 = arith.constant 0 : index
    %192 = vector.load %arg4[%c0_153, %c0_154, %c0_155, %c0_156] : memref<1x8x16x16xf32, #tpu.memory_space<vmem>>, vector<1x1x16x16xf32>
    %193 = vector.shape_cast %192 : vector<1x1x16x16xf32> to vector<16x16xf32>
    %cst_157 = arith.constant 0.241971448 : f32
    %194 = vector.broadcast %cst_157 : f32 to vector<16x16xf32>
    %195 = arith.mulf %194, %193 : vector<16x16xf32>
    %196 = arith.addf %191, %195 : vector<16x16xf32>
    %c0_158 = arith.constant 0 : index
    %c1_159 = arith.constant 1 : index
    %c0_160 = arith.constant 0 : index
    %c0_161 = arith.constant 0 : index
    %197 = vector.load %arg4[%c0_158, %c1_159, %c0_160, %c0_161] : memref<1x8x16x16xf32, #tpu.memory_space<vmem>>, vector<1x1x16x16xf32>
    %198 = vector.shape_cast %197 : vector<1x1x16x16xf32> to vector<16x16xf32>
    %cst_162 = arith.constant 0.398943484 : f32
    %199 = vector.broadcast %cst_162 : f32 to vector<16x16xf32>
    %200 = arith.mulf %199, %198 : vector<16x16xf32>
    %201 = arith.addf %196, %200 : vector<16x16xf32>
    %c0_163 = arith.constant 0 : index
    %c2_164 = arith.constant 2 : index
    %c0_165 = arith.constant 0 : index
    %c0_166 = arith.constant 0 : index
    %202 = vector.load %arg4[%c0_163, %c2_164, %c0_165, %c0_166] : memref<1x8x16x16xf32, #tpu.memory_space<vmem>>, vector<1x1x16x16xf32>
    %203 = vector.shape_cast %202 : vector<1x1x16x16xf32> to vector<16x16xf32>
    %cst_167 = arith.constant 0.241971448 : f32
    %204 = vector.broadcast %cst_167 : f32 to vector<16x16xf32>
    %205 = arith.mulf %204, %203 : vector<16x16xf32>
    %206 = arith.addf %201, %205 : vector<16x16xf32>
    %c0_168 = arith.constant 0 : index
    %c3_169 = arith.constant 3 : index
    %c0_170 = arith.constant 0 : index
    %c0_171 = arith.constant 0 : index
    %207 = vector.load %arg4[%c0_168, %c3_169, %c0_170, %c0_171] : memref<1x8x16x16xf32, #tpu.memory_space<vmem>>, vector<1x1x16x16xf32>
    %208 = vector.shape_cast %207 : vector<1x1x16x16xf32> to vector<16x16xf32>
    %cst_172 = arith.constant 0.0539911278 : f32
    %209 = vector.broadcast %cst_172 : f32 to vector<16x16xf32>
    %210 = arith.mulf %209, %208 : vector<16x16xf32>
    %211 = arith.addf %206, %210 : vector<16x16xf32>
    %c0_173 = arith.constant 0 : index
    %c4 = arith.constant 4 : index
    %c0_174 = arith.constant 0 : index
    %c0_175 = arith.constant 0 : index
    %212 = vector.load %arg4[%c0_173, %c4, %c0_174, %c0_175] : memref<1x8x16x16xf32, #tpu.memory_space<vmem>>, vector<1x1x16x16xf32>
    %213 = vector.shape_cast %212 : vector<1x1x16x16xf32> to vector<16x16xf32>
    %cst_176 = arith.constant 0.00456569204 : f32
    %214 = vector.broadcast %cst_176 : f32 to vector<16x16xf32>
    %215 = arith.mulf %214, %213 : vector<16x16xf32>
    %216 = arith.addf %211, %215 : vector<16x16xf32>
    %c0_177 = arith.constant 0 : index
    %c0_178 = arith.constant 0 : index
    %217 = vector.load %arg2[%c0_177, %c0_178] : memref<16x16xf32, #tpu.memory_space<vmem>>, vector<16x16xf32>
    %cst_179 = arith.constant dense<0.000000e+00> : vector<16x16xf32>
    %218 = tpu.matmul %217, %216, %cst_179 {dimension_numbers = #tpu.dot_dimension_numbers<[1], [0], [0], [1], [0, 0, 1, 1], [], []>} : vector<16x16xf32>, vector<16x16xf32>, vector<16x16xf32> -> vector<16x16xf32>
    %c0_180 = arith.constant 0 : index
    %c0_181 = arith.constant 0 : index
    %219 = vector.load %arg3[%c0_180, %c0_181] : memref<16x16xf32, #tpu.memory_space<vmem>>, vector<16x16xf32>
    %cst_182 = arith.constant dense<0.000000e+00> : vector<16x16xf32>
    %220 = tpu.matmul %218, %219, %cst_182 {dimension_numbers = #tpu.dot_dimension_numbers<[1], [0], [0], [1], [0, 0, 1, 1], [], []>} : vector<16x16xf32>, vector<16x16xf32>, vector<16x16xf32> -> vector<16x16xf32>
    %c0_183 = arith.constant 0 : index
    %c1_184 = arith.constant 1 : index
    %c0_185 = arith.constant 0 : index
    %c0_186 = arith.constant 0 : index
    %221 = vector.load %arg6[%c0_183, %c1_184, %c0_185, %c0_186] : memref<1x8x16x16xf32, #tpu.memory_space<vmem>>, vector<1x1x16x16xf32>
    %222 = vector.shape_cast %221 : vector<1x1x16x16xf32> to vector<16x16xf32>
    %223 = vector.shape_cast %220 : vector<16x16xf32> to vector<1x1x16x16xf32>
    tpu.vector_store %arg6[%c0_183, %c1_184, %c0_185, %c0_186], %223 {strides = array<i32>} : memref<1x8x16x16xf32, #tpu.memory_space<vmem>>, vector<1x1x16x16xf32>,
    %c2_187 = arith.constant 2 : index
    %c0_188 = arith.constant 0 : index
    %c0_189 = arith.constant 0 : index
    %224 = vector.load %arg7[%c2_187, %c0_188, %c0_189] : memref<3x16x16xf32, #tpu.memory_space<vmem>>, vector<1x16x16xf32>
    %225 = vector.shape_cast %224 : vector<1x16x16xf32> to vector<16x16xf32>
    %cst_190 = arith.constant 0.00456569204 : f32
    %226 = vector.broadcast %cst_190 : f32 to vector<16x16xf32>
    %227 = arith.mulf %226, %225 : vector<16x16xf32>
    %c0_191 = arith.constant 0 : index
    %c0_192 = arith.constant 0 : index
    %c0_193 = arith.constant 0 : index
    %c0_194 = arith.constant 0 : index
    %228 = vector.load %arg4[%c0_191, %c0_192, %c0_193, %c0_194] : memref<1x8x16x16xf32, #tpu.memory_space<vmem>>, vector<1x1x16x16xf32>
    %229 = vector.shape_cast %228 : vector<1x1x16x16xf32> to vector<16x16xf32>
    %cst_195 = arith.constant 0.0539911278 : f32
    %230 = vector.broadcast %cst_195 : f32 to vector<16x16xf32>
    %231 = arith.mulf %230, %229 : vector<16x16xf32>
    %232 = arith.addf %227, %231 : vector<16x16xf32>
    %c0_196 = arith.constant 0 : index
    %c1_197 = arith.constant 1 : index
    %c0_198 = arith.constant 0 : index
    %c0_199 = arith.constant 0 : index
    %233 = vector.load %arg4[%c0_196, %c1_197, %c0_198, %c0_199] : memref<1x8x16x16xf32, #tpu.memory_space<vmem>>, vector<1x1x16x16xf32>
    %234 = vector.shape_cast %233 : vector<1x1x16x16xf32> to vector<16x16xf32>
    %cst_200 = arith.constant 0.241971448 : f32
    %235 = vector.broadcast %cst_200 : f32 to vector<16x16xf32>
    %236 = arith.mulf %235, %234 : vector<16x16xf32>
    %237 = arith.addf %232, %236 : vector<16x16xf32>
    %c0_201 = arith.constant 0 : index
    %c2_202 = arith.constant 2 : index
    %c0_203 = arith.constant 0 : index
    %c0_204 = arith.constant 0 : index
    %238 = vector.load %arg4[%c0_201, %c2_202, %c0_203, %c0_204] : memref<1x8x16x16xf32, #tpu.memory_space<vmem>>, vector<1x1x16x16xf32>
    %239 = vector.shape_cast %238 : vector<1x1x16x16xf32> to vector<16x16xf32>
    %cst_205 = arith.constant 0.398943484 : f32
    %240 = vector.broadcast %cst_205 : f32 to vector<16x16xf32>
    %241 = arith.mulf %240, %239 : vector<16x16xf32>
    %242 = arith.addf %237, %241 : vector<16x16xf32>
    %c0_206 = arith.constant 0 : index
    %c3_207 = arith.constant 3 : index
    %c0_208 = arith.constant 0 : index
    %c0_209 = arith.constant 0 : index
    %243 = vector.load %arg4[%c0_206, %c3_207, %c0_208, %c0_209] : memref<1x8x16x16xf32, #tpu.memory_space<vmem>>, vector<1x1x16x16xf32>
    %244 = vector.shape_cast %243 : vector<1x1x16x16xf32> to vector<16x16xf32>
    %cst_210 = arith.constant 0.241971448 : f32
    %245 = vector.broadcast %cst_210 : f32 to vector<16x16xf32>
    %246 = arith.mulf %245, %244 : vector<16x16xf32>
    %247 = arith.addf %242, %246 : vector<16x16xf32>
    %c0_211 = arith.constant 0 : index
    %c4_212 = arith.constant 4 : index
    %c0_213 = arith.constant 0 : index
    %c0_214 = arith.constant 0 : index
    %248 = vector.load %arg4[%c0_211, %c4_212, %c0_213, %c0_214] : memref<1x8x16x16xf32, #tpu.memory_space<vmem>>, vector<1x1x16x16xf32>
    %249 = vector.shape_cast %248 : vector<1x1x16x16xf32> to vector<16x16xf32>
    %cst_215 = arith.constant 0.0539911278 : f32
    %250 = vector.broadcast %cst_215 : f32 to vector<16x16xf32>
    %251 = arith.mulf %250, %249 : vector<16x16xf32>
    %252 = arith.addf %247, %251 : vector<16x16xf32>
    %c0_216 = arith.constant 0 : index
    %c5 = arith.constant 5 : index
    %c0_217 = arith.constant 0 : index
    %c0_218 = arith.constant 0 : index
    %253 = vector.load %arg4[%c0_216, %c5, %c0_217, %c0_218] : memref<1x8x16x16xf32, #tpu.memory_space<vmem>>, vector<1x1x16x16xf32>
    %254 = vector.shape_cast %253 : vector<1x1x16x16xf32> to vector<16x16xf32>
    %cst_219 = arith.constant 0.00456569204 : f32
    %255 = vector.broadcast %cst_219 : f32 to vector<16x16xf32>
    %256 = arith.mulf %255, %254 : vector<16x16xf32>
    %257 = arith.addf %252, %256 : vector<16x16xf32>
    %c0_220 = arith.constant 0 : index
    %c0_221 = arith.constant 0 : index
    %258 = vector.load %arg2[%c0_220, %c0_221] : memref<16x16xf32, #tpu.memory_space<vmem>>, vector<16x16xf32>
    %cst_222 = arith.constant dense<0.000000e+00> : vector<16x16xf32>
    %259 = tpu.matmul %258, %257, %cst_222 {dimension_numbers = #tpu.dot_dimension_numbers<[1], [0], [0], [1], [0, 0, 1, 1], [], []>} : vector<16x16xf32>, vector<16x16xf32>, vector<16x16xf32> -> vector<16x16xf32>
    %c0_223 = arith.constant 0 : index
    %c0_224 = arith.constant 0 : index
    %260 = vector.load %arg3[%c0_223, %c0_224] : memref<16x16xf32, #tpu.memory_space<vmem>>, vector<16x16xf32>
    %cst_225 = arith.constant dense<0.000000e+00> : vector<16x16xf32>
    %261 = tpu.matmul %259, %260, %cst_225 {dimension_numbers = #tpu.dot_dimension_numbers<[1], [0], [0], [1], [0, 0, 1, 1], [], []>} : vector<16x16xf32>, vector<16x16xf32>, vector<16x16xf32> -> vector<16x16xf32>
    %c0_226 = arith.constant 0 : index
    %c2_227 = arith.constant 2 : index
    %c0_228 = arith.constant 0 : index
    %c0_229 = arith.constant 0 : index
    %262 = vector.load %arg6[%c0_226, %c2_227, %c0_228, %c0_229] : memref<1x8x16x16xf32, #tpu.memory_space<vmem>>, vector<1x1x16x16xf32>
    %263 = vector.shape_cast %262 : vector<1x1x16x16xf32> to vector<16x16xf32>
    %264 = vector.shape_cast %261 : vector<16x16xf32> to vector<1x1x16x16xf32>
    tpu.vector_store %arg6[%c0_226, %c2_227, %c0_228, %c0_229], %264 {strides = array<i32>} : memref<1x8x16x16xf32, #tpu.memory_space<vmem>>, vector<1x1x16x16xf32>,
    %c0_230 = arith.constant 0 : index
    %c2_231 = arith.constant 2 : index
    %c0_232 = arith.constant 0 : index
    %c0_233 = arith.constant 0 : index
    %265 = vector.load %arg4[%c0_230, %c2_231, %c0_232, %c0_233] : memref<1x8x16x16xf32, #tpu.memory_space<vmem>>, vector<1x1x16x16xf32>
    %266 = vector.shape_cast %265 : vector<1x1x16x16xf32> to vector<16x16xf32>
    %cst_234 = arith.constant 0.00456569204 : f32
    %267 = vector.broadcast %cst_234 : f32 to vector<16x16xf32>
    %268 = arith.mulf %267, %266 : vector<16x16xf32>
    %c0_235 = arith.constant 0 : index
    %c3_236 = arith.constant 3 : index
    %c0_237 = arith.constant 0 : index
    %c0_238 = arith.constant 0 : index
    %269 = vector.load %arg4[%c0_235, %c3_236, %c0_237, %c0_238] : memref<1x8x16x16xf32, #tpu.memory_space<vmem>>, vector<1x1x16x16xf32>
    %270 = vector.shape_cast %269 : vector<1x1x16x16xf32> to vector<16x16xf32>
    %cst_239 = arith.constant 0.0539911278 : f32
    %271 = vector.broadcast %cst_239 : f32 to vector<16x16xf32>
    %272 = arith.mulf %271, %270 : vector<16x16xf32>
    %273 = arith.addf %268, %272 : vector<16x16xf32>
    %c0_240 = arith.constant 0 : index
    %c4_241 = arith.constant 4 : index
    %c0_242 = arith.constant 0 : index
    %c0_243 = arith.constant 0 : index
    %274 = vector.load %arg4[%c0_240, %c4_241, %c0_242, %c0_243] : memref<1x8x16x16xf32, #tpu.memory_space<vmem>>, vector<1x1x16x16xf32>
    %275 = vector.shape_cast %274 : vector<1x1x16x16xf32> to vector<16x16xf32>
    %cst_244 = arith.constant 0.241971448 : f32
    %276 = vector.broadcast %cst_244 : f32 to vector<16x16xf32>
    %277 = arith.mulf %276, %275 : vector<16x16xf32>
    %278 = arith.addf %273, %277 : vector<16x16xf32>
    %c0_245 = arith.constant 0 : index
    %c5_246 = arith.constant 5 : index
    %c0_247 = arith.constant 0 : index
    %c0_248 = arith.constant 0 : index
    %279 = vector.load %arg4[%c0_245, %c5_246, %c0_247, %c0_248] : memref<1x8x16x16xf32, #tpu.memory_space<vmem>>, vector<1x1x16x16xf32>
    %280 = vector.shape_cast %279 : vector<1x1x16x16xf32> to vector<16x16xf32>
    %cst_249 = arith.constant 0.398943484 : f32
    %281 = vector.broadcast %cst_249 : f32 to vector<16x16xf32>
    %282 = arith.mulf %281, %280 : vector<16x16xf32>
    %283 = arith.addf %278, %282 : vector<16x16xf32>
    %c0_250 = arith.constant 0 : index
    %c6 = arith.constant 6 : index
    %c0_251 = arith.constant 0 : index
    %c0_252 = arith.constant 0 : index
    %284 = vector.load %arg4[%c0_250, %c6, %c0_251, %c0_252] : memref<1x8x16x16xf32, #tpu.memory_space<vmem>>, vector<1x1x16x16xf32>
    %285 = vector.shape_cast %284 : vector<1x1x16x16xf32> to vector<16x16xf32>
    %cst_253 = arith.constant 0.241971448 : f32
    %286 = vector.broadcast %cst_253 : f32 to vector<16x16xf32>
    %287 = arith.mulf %286, %285 : vector<16x16xf32>
    %288 = arith.addf %283, %287 : vector<16x16xf32>
    %c0_254 = arith.constant 0 : index
    %c7 = arith.constant 7 : index
    %c0_255 = arith.constant 0 : index
    %c0_256 = arith.constant 0 : index
    %289 = vector.load %arg4[%c0_254, %c7, %c0_255, %c0_256] : memref<1x8x16x16xf32, #tpu.memory_space<vmem>>, vector<1x1x16x16xf32>
    %290 = vector.shape_cast %289 : vector<1x1x16x16xf32> to vector<16x16xf32>
    %cst_257 = arith.constant 0.0539911278 : f32
    %291 = vector.broadcast %cst_257 : f32 to vector<16x16xf32>
    %292 = arith.mulf %291, %290 : vector<16x16xf32>
    %293 = arith.addf %288, %292 : vector<16x16xf32>
    %c0_258 = arith.constant 0 : index
    %c0_259 = arith.constant 0 : index
    %c0_260 = arith.constant 0 : index
    %294 = vector.load %arg8[%c0_258, %c0_259, %c0_260] : memref<3x16x16xf32, #tpu.memory_space<vmem>>, vector<1x16x16xf32>
    %295 = vector.shape_cast %294 : vector<1x16x16xf32> to vector<16x16xf32>
    %cst_261 = arith.constant 0.00456569204 : f32
    %296 = vector.broadcast %cst_261 : f32 to vector<16x16xf32>
    %297 = arith.mulf %296, %295 : vector<16x16xf32>
    %298 = arith.addf %293, %297 : vector<16x16xf32>
    %c0_262 = arith.constant 0 : index
    %c0_263 = arith.constant 0 : index
    %299 = vector.load %arg2[%c0_262, %c0_263] : memref<16x16xf32, #tpu.memory_space<vmem>>, vector<16x16xf32>
    %cst_264 = arith.constant dense<0.000000e+00> : vector<16x16xf32>
    %300 = tpu.matmul %299, %298, %cst_264 {dimension_numbers = #tpu.dot_dimension_numbers<[1], [0], [0], [1], [0, 0, 1, 1], [], []>} : vector<16x16xf32>, vector<16x16xf32>, vector<16x16xf32> -> vector<16x16xf32>
    %c0_265 = arith.constant 0 : index
    %c0_266 = arith.constant 0 : index
    %301 = vector.load %arg3[%c0_265, %c0_266] : memref<16x16xf32, #tpu.memory_space<vmem>>, vector<16x16xf32>
    %cst_267 = arith.constant dense<0.000000e+00> : vector<16x16xf32>
    %302 = tpu.matmul %300, %301, %cst_267 {dimension_numbers = #tpu.dot_dimension_numbers<[1], [0], [0], [1], [0, 0, 1, 1], [], []>} : vector<16x16xf32>, vector<16x16xf32>, vector<16x16xf32> -> vector<16x16xf32>
    %c0_268 = arith.constant 0 : index
    %c5_269 = arith.constant 5 : index
    %c0_270 = arith.constant 0 : index
    %c0_271 = arith.constant 0 : index
    %303 = vector.load %arg6[%c0_268, %c5_269, %c0_270, %c0_271] : memref<1x8x16x16xf32, #tpu.memory_space<vmem>>, vector<1x1x16x16xf32>
    %304 = vector.shape_cast %303 : vector<1x1x16x16xf32> to vector<16x16xf32>
    %305 = vector.shape_cast %302 : vector<16x16xf32> to vector<1x1x16x16xf32>
    tpu.vector_store %arg6[%c0_268, %c5_269, %c0_270, %c0_271], %305 {strides = array<i32>} : memref<1x8x16x16xf32, #tpu.memory_space<vmem>>, vector<1x1x16x16xf32>,
    %c0_272 = arith.constant 0 : index
    %c3_273 = arith.constant 3 : index
    %c0_274 = arith.constant 0 : index
    %c0_275 = arith.constant 0 : index
    %306 = vector.load %arg4[%c0_272, %c3_273, %c0_274, %c0_275] : memref<1x8x16x16xf32, #tpu.memory_space<vmem>>, vector<1x1x16x16xf32>
    %307 = vector.shape_cast %306 : vector<1x1x16x16xf32> to vector<16x16xf32>
    %cst_276 = arith.constant 0.00456569204 : f32
    %308 = vector.broadcast %cst_276 : f32 to vector<16x16xf32>
    %309 = arith.mulf %308, %307 : vector<16x16xf32>
    %c0_277 = arith.constant 0 : index
    %c4_278 = arith.constant 4 : index
    %c0_279 = arith.constant 0 : index
    %c0_280 = arith.constant 0 : index
    %310 = vector.load %arg4[%c0_277, %c4_278, %c0_279, %c0_280] : memref<1x8x16x16xf32, #tpu.memory_space<vmem>>, vector<1x1x16x16xf32>
    %311 = vector.shape_cast %310 : vector<1x1x16x16xf32> to vector<16x16xf32>
    %cst_281 = arith.constant 0.0539911278 : f32
    %312 = vector.broadcast %cst_281 : f32 to vector<16x16xf32>
    %313 = arith.mulf %312, %311 : vector<16x16xf32>
    %314 = arith.addf %309, %313 : vector<16x16xf32>
    %c0_282 = arith.constant 0 : index
    %c5_283 = arith.constant 5 : index
    %c0_284 = arith.constant 0 : index
    %c0_285 = arith.constant 0 : index
    %315 = vector.load %arg4[%c0_282, %c5_283, %c0_284, %c0_285] : memref<1x8x16x16xf32, #tpu.memory_space<vmem>>, vector<1x1x16x16xf32>
    %316 = vector.shape_cast %315 : vector<1x1x16x16xf32> to vector<16x16xf32>
    %cst_286 = arith.constant 0.241971448 : f32
    %317 = vector.broadcast %cst_286 : f32 to vector<16x16xf32>
    %318 = arith.mulf %317, %316 : vector<16x16xf32>
    %319 = arith.addf %314, %318 : vector<16x16xf32>
    %c0_287 = arith.constant 0 : index
    %c6_288 = arith.constant 6 : index
    %c0_289 = arith.constant 0 : index
    %c0_290 = arith.constant 0 : index
    %320 = vector.load %arg4[%c0_287, %c6_288, %c0_289, %c0_290] : memref<1x8x16x16xf32, #tpu.memory_space<vmem>>, vector<1x1x16x16xf32>
    %321 = vector.shape_cast %320 : vector<1x1x16x16xf32> to vector<16x16xf32>
    %cst_291 = arith.constant 0.398943484 : f32
    %322 = vector.broadcast %cst_291 : f32 to vector<16x16xf32>
    %323 = arith.mulf %322, %321 : vector<16x16xf32>
    %324 = arith.addf %319, %323 : vector<16x16xf32>
    %c0_292 = arith.constant 0 : index
    %c7_293 = arith.constant 7 : index
    %c0_294 = arith.constant 0 : index
    %c0_295 = arith.constant 0 : index
    %325 = vector.load %arg4[%c0_292, %c7_293, %c0_294, %c0_295] : memref<1x8x16x16xf32, #tpu.memory_space<vmem>>, vector<1x1x16x16xf32>
    %326 = vector.shape_cast %325 : vector<1x1x16x16xf32> to vector<16x16xf32>
    %cst_296 = arith.constant 0.241971448 : f32
    %327 = vector.broadcast %cst_296 : f32 to vector<16x16xf32>
    %328 = arith.mulf %327, %326 : vector<16x16xf32>
    %329 = arith.addf %324, %328 : vector<16x16xf32>
    %c0_297 = arith.constant 0 : index
    %c0_298 = arith.constant 0 : index
    %c0_299 = arith.constant 0 : index
    %330 = vector.load %arg8[%c0_297, %c0_298, %c0_299] : memref<3x16x16xf32, #tpu.memory_space<vmem>>, vector<1x16x16xf32>
    %331 = vector.shape_cast %330 : vector<1x16x16xf32> to vector<16x16xf32>
    %cst_300 = arith.constant 0.0539911278 : f32
    %332 = vector.broadcast %cst_300 : f32 to vector<16x16xf32>
    %333 = arith.mulf %332, %331 : vector<16x16xf32>
    %334 = arith.addf %329, %333 : vector<16x16xf32>
    %c1_301 = arith.constant 1 : index
    %c0_302 = arith.constant 0 : index
    %c0_303 = arith.constant 0 : index
    %335 = vector.load %arg8[%c1_301, %c0_302, %c0_303] : memref<3x16x16xf32, #tpu.memory_space<vmem>>, vector<1x16x16xf32>
    %336 = vector.shape_cast %335 : vector<1x16x16xf32> to vector<16x16xf32>
    %cst_304 = arith.constant 0.00456569204 : f32
    %337 = vector.broadcast %cst_304 : f32 to vector<16x16xf32>
    %338 = arith.mulf %337, %336 : vector<16x16xf32>
    %339 = arith.addf %334, %338 : vector<16x16xf32>
    %c0_305 = arith.constant 0 : index
    %c0_306 = arith.constant 0 : index
    %340 = vector.load %arg2[%c0_305, %c0_306] : memref<16x16xf32, #tpu.memory_space<vmem>>, vector<16x16xf32>
    %cst_307 = arith.constant dense<0.000000e+00> : vector<16x16xf32>
    %341 = tpu.matmul %340, %339, %cst_307 {dimension_numbers = #tpu.dot_dimension_numbers<[1], [0], [0], [1], [0, 0, 1, 1], [], []>} : vector<16x16xf32>, vector<16x16xf32>, vector<16x16xf32> -> vector<16x16xf32>
    %c0_308 = arith.constant 0 : index
    %c0_309 = arith.constant 0 : index
    %342 = vector.load %arg3[%c0_308, %c0_309] : memref<16x16xf32, #tpu.memory_space<vmem>>, vector<16x16xf32>
    %cst_310 = arith.constant dense<0.000000e+00> : vector<16x16xf32>
    %343 = tpu.matmul %341, %342, %cst_310 {dimension_numbers = #tpu.dot_dimension_numbers<[1], [0], [0], [1], [0, 0, 1, 1], [], []>} : vector<16x16xf32>, vector<16x16xf32>, vector<16x16xf32> -> vector<16x16xf32>
    %c0_311 = arith.constant 0 : index
    %c6_312 = arith.constant 6 : index
    %c0_313 = arith.constant 0 : index
    %c0_314 = arith.constant 0 : index
    %344 = vector.load %arg6[%c0_311, %c6_312, %c0_313, %c0_314] : memref<1x8x16x16xf32, #tpu.memory_space<vmem>>, vector<1x1x16x16xf32>
    %345 = vector.shape_cast %344 : vector<1x1x16x16xf32> to vector<16x16xf32>
    %346 = vector.shape_cast %343 : vector<16x16xf32> to vector<1x1x16x16xf32>
    tpu.vector_store %arg6[%c0_311, %c6_312, %c0_313, %c0_314], %346 {strides = array<i32>} : memref<1x8x16x16xf32, #tpu.memory_space<vmem>>, vector<1x1x16x16xf32>,
    %c0_315 = arith.constant 0 : index
    %c4_316 = arith.constant 4 : index
    %c0_317 = arith.constant 0 : index
    %c0_318 = arith.constant 0 : index
    %347 = vector.load %arg4[%c0_315, %c4_316, %c0_317, %c0_318] : memref<1x8x16x16xf32, #tpu.memory_space<vmem>>, vector<1x1x16x16xf32>
    %348 = vector.shape_cast %347 : vector<1x1x16x16xf32> to vector<16x16xf32>
    %cst_319 = arith.constant 0.00456569204 : f32
    %349 = vector.broadcast %cst_319 : f32 to vector<16x16xf32>
    %350 = arith.mulf %349, %348 : vector<16x16xf32>
    %c0_320 = arith.constant 0 : index
    %c5_321 = arith.constant 5 : index
    %c0_322 = arith.constant 0 : index
    %c0_323 = arith.constant 0 : index
    %351 = vector.load %arg4[%c0_320, %c5_321, %c0_322, %c0_323] : memref<1x8x16x16xf32, #tpu.memory_space<vmem>>, vector<1x1x16x16xf32>
    %352 = vector.shape_cast %351 : vector<1x1x16x16xf32> to vector<16x16xf32>
    %cst_324 = arith.constant 0.0539911278 : f32
    %353 = vector.broadcast %cst_324 : f32 to vector<16x16xf32>
    %354 = arith.mulf %353, %352 : vector<16x16xf32>
    %355 = arith.addf %350, %354 : vector<16x16xf32>
    %c0_325 = arith.constant 0 : index
    %c6_326 = arith.constant 6 : index
    %c0_327 = arith.constant 0 : index
    %c0_328 = arith.constant 0 : index
    %356 = vector.load %arg4[%c0_325, %c6_326, %c0_327, %c0_328] : memref<1x8x16x16xf32, #tpu.memory_space<vmem>>, vector<1x1x16x16xf32>
    %357 = vector.shape_cast %356 : vector<1x1x16x16xf32> to vector<16x16xf32>
    %cst_329 = arith.constant 0.241971448 : f32
    %358 = vector.broadcast %cst_329 : f32 to vector<16x16xf32>
    %359 = arith.mulf %358, %357 : vector<16x16xf32>
    %360 = arith.addf %355, %359 : vector<16x16xf32>
    %c0_330 = arith.constant 0 : index
    %c7_331 = arith.constant 7 : index
    %c0_332 = arith.constant 0 : index
    %c0_333 = arith.constant 0 : index
    %361 = vector.load %arg4[%c0_330, %c7_331, %c0_332, %c0_333] : memref<1x8x16x16xf32, #tpu.memory_space<vmem>>, vector<1x1x16x16xf32>
    %362 = vector.shape_cast %361 : vector<1x1x16x16xf32> to vector<16x16xf32>
    %cst_334 = arith.constant 0.398943484 : f32
    %363 = vector.broadcast %cst_334 : f32 to vector<16x16xf32>
    %364 = arith.mulf %363, %362 : vector<16x16xf32>
    %365 = arith.addf %360, %364 : vector<16x16xf32>
    %c0_335 = arith.constant 0 : index
    %c0_336 = arith.constant 0 : index
    %c0_337 = arith.constant 0 : index
    %366 = vector.load %arg8[%c0_335, %c0_336, %c0_337] : memref<3x16x16xf32, #tpu.memory_space<vmem>>, vector<1x16x16xf32>
    %367 = vector.shape_cast %366 : vector<1x16x16xf32> to vector<16x16xf32>
    %cst_338 = arith.constant 0.241971448 : f32
    %368 = vector.broadcast %cst_338 : f32 to vector<16x16xf32>
    %369 = arith.mulf %368, %367 : vector<16x16xf32>
    %370 = arith.addf %365, %369 : vector<16x16xf32>
    %c1_339 = arith.constant 1 : index
    %c0_340 = arith.constant 0 : index
    %c0_341 = arith.constant 0 : index
    %371 = vector.load %arg8[%c1_339, %c0_340, %c0_341] : memref<3x16x16xf32, #tpu.memory_space<vmem>>, vector<1x16x16xf32>
    %372 = vector.shape_cast %371 : vector<1x16x16xf32> to vector<16x16xf32>
    %cst_342 = arith.constant 0.0539911278 : f32
    %373 = vector.broadcast %cst_342 : f32 to vector<16x16xf32>
    %374 = arith.mulf %373, %372 : vector<16x16xf32>
    %375 = arith.addf %370, %374 : vector<16x16xf32>
    %c2_343 = arith.constant 2 : index
    %c0_344 = arith.constant 0 : index
    %c0_345 = arith.constant 0 : index
    %376 = vector.load %arg8[%c2_343, %c0_344, %c0_345] : memref<3x16x16xf32, #tpu.memory_space<vmem>>, vector<1x16x16xf32>
    %377 = vector.shape_cast %376 : vector<1x16x16xf32> to vector<16x16xf32>
    %cst_346 = arith.constant 0.00456569204 : f32
    %378 = vector.broadcast %cst_346 : f32 to vector<16x16xf32>
    %379 = arith.mulf %378, %377 : vector<16x16xf32>
    %380 = arith.addf %375, %379 : vector<16x16xf32>
    %c0_347 = arith.constant 0 : index
    %c0_348 = arith.constant 0 : index
    %381 = vector.load %arg2[%c0_347, %c0_348] : memref<16x16xf32, #tpu.memory_space<vmem>>, vector<16x16xf32>
    %cst_349 = arith.constant dense<0.000000e+00> : vector<16x16xf32>
    %382 = tpu.matmul %381, %380, %cst_349 {dimension_numbers = #tpu.dot_dimension_numbers<[1], [0], [0], [1], [0, 0, 1, 1], [], []>} : vector<16x16xf32>, vector<16x16xf32>, vector<16x16xf32> -> vector<16x16xf32>
    %c0_350 = arith.constant 0 : index
    %c0_351 = arith.constant 0 : index
    %383 = vector.load %arg3[%c0_350, %c0_351] : memref<16x16xf32, #tpu.memory_space<vmem>>, vector<16x16xf32>
    %cst_352 = arith.constant dense<0.000000e+00> : vector<16x16xf32>
    %384 = tpu.matmul %382, %383, %cst_352 {dimension_numbers = #tpu.dot_dimension_numbers<[1], [0], [0], [1], [0, 0, 1, 1], [], []>} : vector<16x16xf32>, vector<16x16xf32>, vector<16x16xf32> -> vector<16x16xf32>
    %c0_353 = arith.constant 0 : index
    %c7_354 = arith.constant 7 : index
    %c0_355 = arith.constant 0 : index
    %c0_356 = arith.constant 0 : index
    %385 = vector.load %arg6[%c0_353, %c7_354, %c0_355, %c0_356] : memref<1x8x16x16xf32, #tpu.memory_space<vmem>>, vector<1x1x16x16xf32>
    %386 = vector.shape_cast %385 : vector<1x1x16x16xf32> to vector<16x16xf32>
    %387 = vector.shape_cast %384 : vector<16x16xf32> to vector<1x1x16x16xf32>
    tpu.vector_store %arg6[%c0_353, %c7_354, %c0_355, %c0_356], %387 {strides = array<i32>} : memref<1x8x16x16xf32, #tpu.memory_space<vmem>>, vector<1x1x16x16xf32>,
    return
  }
  func.func @transform_0(%arg0: i32, %arg1: i32) -> (i32, i32) {
    %c0_i32 = arith.constant 0 : i32
    %c0_i32_0 = arith.constant 0 : i32
    %c0_i32_1 = arith.constant 0 : i32
    return %c0_i32, %c0_i32_0 : i32, i32
  }
  func.func @transform_1(%arg0: i32, %arg1: i32) -> (i32, i32) {
    %c0_i32 = arith.constant 0 : i32
    %c0_i32_0 = arith.constant 0 : i32
    %c0_i32_1 = arith.constant 0 : i32
    return %c0_i32, %c0_i32_0 : i32, i32
  }
  func.func @transform_2(%arg0: i32, %arg1: i32) -> (i32, i32, i32, i32) {
    %c0_i32 = arith.constant 0 : i32
    %c0_i32_0 = arith.constant 0 : i32
    %c0_i32_1 = arith.constant 0 : i32
    return %arg0, %arg1, %c0_i32, %c0_i32_0 : i32, i32, i32, i32
  }
  func.func @transform_4(%arg0: i32, %arg1: i32) -> (i32, i32, i32, i32) {
    %c0_i32 = arith.constant 0 : i32
    %c0_i32_0 = arith.constant 0 : i32
    %c0_i32_1 = arith.constant 0 : i32
    return %arg0, %arg1, %c0_i32, %c0_i32_0 : i32, i32, i32, i32
  }
}

</mosaic_0001>

<llo_original>
// kernel: tpu_custom_call.1
$region0: #{tpu_custom_call.1}
  #allocation0 [shape = 'u32[]', space=smem, size = 0x4, offset = 0x4, fixed_abs, tag = 'smem constant byte address 0x4 - core index']
  #allocation1 [shape = 'u32[72,128]{1,0:T(1,128)}', space=vmem, size = 0x9000, scoped, tag = 'internal scratch']
  #allocation2 [shape = 'f32[3,16,16]{2,1,0:T(8,128)}', space=vmem, size = 0x6000, scoped, tag = 'scratch operand']
  #allocation3 [shape = 'f32[3,16,16]{2,1,0:T(8,128)}', space=vmem, size = 0x6000, scoped, tag = 'scratch operand']
  #allocation4 [shape = 's32[2]{0}', space=sflag, size = 0x8, scoped, tag = 'scratch operand']
  #allocation12 [shape = 's32[]', space=sflag, size = 0x4, offset = 0, fixed_abs, tag = 'sflag constant byte address 0x0 - dummy sync flag']
  #allocation13 [shape = 's32[]', space=sflag, size = 0x4, offset = 0, fixed_abs, tag = 'sflag constant byte address 0x0 - dummy sync flag']
  #allocation14 [shape = 'u32[]', space=smem, size = 0x4, offset = 0x44, fixed_abs, tag = 'smem constant byte address 0x44 - assertion arg 0']
  #allocation15 [shape = 'u32[]', space=smem, size = 0x4, offset = 0x48, fixed_abs, tag = 'smem constant byte address 0x48 - assertion arg 1']
  #allocation16 [shape = 's32[]', space=sflag, size = 0x4, offset = 0, fixed_abs, tag = 'sflag constant byte address 0x0 - dummy sync flag']
  #allocation17 [shape = 's32[]', space=sflag, size = 0x4, offset = 0, fixed_abs, tag = 'sflag constant byte address 0x0 - dummy sync flag']
  %s0 = inlined_call_operand.hbm [shape: f32[16,16], index: 0, kind: input, shape index: {}]
  %s1 = inlined_call_operand.hbm [shape: f32[16,16], index: 1, kind: input, shape index: {}]
  %s2 = inlined_call_operand.hbm [shape: f32[2,16,16,16], index: 2, kind: input, shape index: {}]
  %s3 = inlined_call_operand.hbm [shape: f32[2,16,16,16], index: 3, kind: input, shape index: {}]
  %s4 = inlined_call_operand.hbm [shape: f32[2,16,16,16], index: 4, kind: output, shape index: {}]
  %s5 = sld [smem:[#allocation0]]
  $region89: #{tpu_custom_call.1} parent=0
    _
  %s7 = ssub.s32 1, %s5
  %s8 = scalar_select 0, %s7, %s5
  $region1: #{tpu_custom_call.1} parent=0
    #allocation5 [shape = 'u8[8192]{0}', space=vmem, size = 0x2000, scoped, tag = 'input window, operand 0, single buffered']
    #allocation6 [shape = 's32[2]{0}', space=sflag, size = 0x8, scoped, tag = 'scoped memory for tpu_custom_call.1']
    #allocation7 [shape = 's32[2]{0}', space=sflag, size = 0x8, scoped, tag = 'scoped memory for tpu_custom_call.1']
    #allocation8 [shape = 'u8[8192]{0}', space=vmem, size = 0x2000, scoped, tag = 'input window, operand 1, single buffered']
    #allocation9 [shape = 's32[1]{0}', space=sflag, size = 0x4, scoped, tag = 'scoped memory for tpu_custom_call.1']
    #allocation10 [shape = 'u8[131072]{0}', space=vmem, size = 0x20000, scoped, tag = 'input window, operand 2']
    #allocation11 [shape = 'u8[131072]{0}', space=vmem, size = 0x20000, scoped, tag = 'output window, operand 0']
    %9 = vsyncpa [#allocation6], 0
    %10 = vsyncpa [#allocation9], 0
    %11 = vsyncpa [#allocation7], 0
    %s12 = scalar_lea.sflag [#allocation7], 1
    %13 = vsyncpa %s12, 0
    loop: start=0, step=1, limit=6
    $region2: #{tpu_custom_call.1} parent=1 // loop_pre_header
      _
    $region3: #{tpu_custom_call.1} parent=1 // loop_header
      %s15 = sphi 0, %s19
      %p16 = scmp.ge.s32.totalorder %s15, 6
      %s22 = sphi 0, %s34
      %s23 = sphi 0, %s30
      %s24 = sphi 0, %s22
      %s25 = sphi 0, %s23
      %s26 = sphi 0, %s24
      %s27 = sphi 0, %s25
      %s35 = sphi 0, %s35
      %s37 = sphi 0, %s35
      %s38 = sphi 0, %s37
      %s52 = sphi 0, %s38
      %s56 = sphi 0, %s56
      %s58 = sphi 0, %s56
      %s59 = sphi 0, %s58
      %s73 = sphi 0, %s59
      %s81 = sphi 0, %s83
      %s84 = sphi 0, %s81
      %s85 = sphi 0, %s84
      %s101 = sphi 0, %s85
      %s109 = sphi 0, %s111
      %s112 = sphi 0, %s109
      %s113 = sphi 0, %s112
      %s129 = sphi 0, %s113
    $region4: #{tpu_custom_call.1} parent=1 // loop_header_branch
      %18 = sbr.rel (%p16) target = $region8
    $region5: #{tpu_custom_call.1} parent=1 // loop_body
      %s20 = ssub.s32 %s15, 1
      %s21 = ssub.s32 %s15, 2
      %s28 = sadd.s32 1, %s23
      %p29 = scmp.ge.s32.totalorder %s28, 2
      %s30 = scalar_select %p29, 0, %s28
      %s31 = sadd.s32 1, %s22
      %s32 = scalar_select %p29, %s31, %s22
      %p33 = scmp.ge.s32.totalorder %s32, 2
      %s34 = scalar_select %p33, 0, %s32
      %s36 = sadd.s32 %s35, 1
      %p39 = scmp.eq.s32.totalorder %s15, 3
      %p40 = scmp.ne.s32.totalorder %s35, %s37
      %p41 = scmp.eq.s32.totalorder %s15, 0
      %p42 = por %p40, %p41
      %p43 = scmp.ne.s32.totalorder %s35, %s37
      %p44 = scmp.eq.s32.totalorder %s20, 3
      %p45 = por %p43, %p44
      %p46 = scmp.ne.s32.totalorder %s37, %s38
      %p47 = scmp.eq.s32.totalorder %s20, 0
      %p48 = por %p46, %p47
      %p49 = scmp.ne.s32.totalorder %s37, %s38
      %p50 = scmp.eq.s32.totalorder %s21, 3
      %p51 = por %p49, %p50
      %p53 = scmp.ne.s32.totalorder %s38, %s52
      %p54 = scmp.eq.s32.totalorder %s21, 0
      %p55 = por %p53, %p54
      %s57 = sadd.s32 %s56, 1
      %p60 = scmp.eq.s32.totalorder %s15, 3
      %p61 = scmp.ne.s32.totalorder %s56, %s58
      %p62 = scmp.eq.s32.totalorder %s15, 0
      %p63 = por %p61, %p62
      %p64 = scmp.ne.s32.totalorder %s56, %s58
      %p65 = scmp.eq.s32.totalorder %s20, 3
      %p66 = por %p64, %p65
      %p67 = scmp.ne.s32.totalorder %s58, %s59
      %p68 = scmp.eq.s32.totalorder %s20, 0
      %p69 = por %p67, %p68
      %p70 = scmp.ne.s32.totalorder %s58, %s59
      %p71 = scmp.eq.s32.totalorder %s21, 3
      %p72 = por %p70, %p71
      %p74 = scmp.ne.s32.totalorder %s59, %s73
      %p75 = scmp.eq.s32.totalorder %s21, 0
      %p76 = por %p74, %p75
      %s77 = ssub.s32 %s22, %s34
      %s78 = ssub.s32 %s23, %s30
      %s79 = sor.u32 %s77, %s78
      %p80 = scmp.eq.s32.totalorder %s79, 0
      %s82 = sadd.s32 %s81, 1
      %s83 = scalar_select %p80, %s81, %s82
      %p86 = pneg %p80
      %p87 = scmp.eq.s32.totalorder %s15, 3
      %p88 = por %p86, %p87
      %p89 = scmp.ne.s32.totalorder %s81, %s84
      %p90 = scmp.eq.s32.totalorder %s15, 0
      %p91 = por %p89, %p90
      %p92 = scmp.ne.s32.totalorder %s81, %s84
      %p93 = scmp.eq.s32.totalorder %s20, 3
      %p94 = por %p92, %p93
      %p95 = scmp.ne.s32.totalorder %s84, %s85
      %p96 = scmp.eq.s32.totalorder %s20, 0
      %p97 = por %p95, %p96
      %p98 = scmp.ne.s32.totalorder %s84, %s85
      %p99 = scmp.eq.s32.totalorder %s21, 3
      %p100 = por %p98, %p99
      %p102 = scmp.ne.s32.totalorder %s85, %s101
      %p103 = scmp.eq.s32.totalorder %s21, 0
      %p104 = por %p102, %p103
      %s105 = ssub.s32 %s22, %s34
      %s106 = ssub.s32 %s23, %s30
      %s107 = sor.u32 %s105, %s106
      %p108 = scmp.eq.s32.totalorder %s107, 0
      %s110 = sadd.s32 %s109, 1
      %s111 = scalar_select %p108, %s109, %s110
      %p114 = pneg %p108
      %p115 = scmp.eq.s32.totalorder %s15, 3
      %p116 = por %p114, %p115
      %p117 = scmp.ne.s32.totalorder %s109, %s112
      %p118 = scmp.eq.s32.totalorder %s15, 0
      %p119 = por %p117, %p118
      %p120 = scmp.ne.s32.totalorder %s109, %s112
      %p121 = scmp.eq.s32.totalorder %s20, 3
      %p122 = por %p120, %p121
      %p123 = scmp.ne.s32.totalorder %s112, %s113
      %p124 = scmp.eq.s32.totalorder %s20, 0
      %p125 = por %p123, %p124
      %p126 = scmp.ne.s32.totalorder %s112, %s113
      %p127 = scmp.eq.s32.totalorder %s21, 3
      %p128 = por %p126, %p127
      %p130 = scmp.ne.s32.totalorder %s113, %s129
      %p131 = scmp.eq.s32.totalorder %s21, 0
      %p132 = por %p130, %p131
      %p133 = scmp.le.s32.totalorder 1, %s15
      %p134 = scmp.lt.s32.totalorder %s15, 5
      %p135 = pnand %p133, %p134
      %p136 = pneg %p135
      // Predicated region
      $region9: #{tpu_custom_call.1} parent=5 // pred_check
        _
      $region10: #{tpu_custom_call.1} parent=5 // pred_check_branch
        %138 = sbr.rel (%p135) target = $region12
      $region11: #{tpu_custom_call.1} parent=5 // pred_region
        %s139 = ssub.s32 %s15, 1
        // Predicated region
        $region13: #{tpu_custom_call.1} parent=11 // pred_check
          %p140 = pneg %p48
        $region14: #{tpu_custom_call.1} parent=11 // pred_check_branch
          %142 = sbr.rel (%p140) target = $region16
        $region15: #{tpu_custom_call.1} parent=11 // pred_region
          %144 = vsyncadd [#allocation6], 0
          %s145 = sshll.u32 %s0, 4
          %s146 = int_to_ptr.hbm [resolvable:$true] %s145
          %s147 = sshll.u32 [#allocation5], 4
          %s148 = int_to_ptr.vmem [resolvable:$true] %s147
          %153 = dma.hbm_to_vmem [thread:$0]  %s146, 256, %s148, [#allocation6], 128, 128, 8
        $region16: #{tpu_custom_call.1} parent=11 // pred_fallthru
          _
        // Predicated region
        $region17: #{tpu_custom_call.1} parent=11 // pred_check
          %p154 = pneg %p69
        $region18: #{tpu_custom_call.1} parent=11 // pred_check_branch
          %156 = sbr.rel (%p154) target = $region20
        $region19: #{tpu_custom_call.1} parent=11 // pred_region
          %158 = vsyncadd [#allocation9], 0
          %s159 = sshll.u32 %s1, 4
          %s160 = int_to_ptr.hbm [resolvable:$true] %s159
          %s161 = sshll.u32 [#allocation8], 4
          %s162 = int_to_ptr.vmem [resolvable:$true] %s161
          %167 = dma.hbm_to_vmem [thread:$0]  %s160, 256, %s162, [#allocation9], 128, 128, 8
        $region20: #{tpu_custom_call.1} parent=11 // pred_fallthru
          _
      $region12: #{tpu_custom_call.1} parent=5 // pred_fallthru
        _
      %p168 = scmp.lt.s32.totalorder %s15, 4
      // Predicated region
      $region21: #{tpu_custom_call.1} parent=5 // pred_check
        %p169 = pneg %p168
      $region22: #{tpu_custom_call.1} parent=5 // pred_check_branch
        %171 = sbr.rel (%p169) target = $region24
      $region23: #{tpu_custom_call.1} parent=5 // pred_region
        // Predicated region
        $region25: #{tpu_custom_call.1} parent=23 // pred_check
          %p172 = pneg %p91
        $region26: #{tpu_custom_call.1} parent=23 // pred_check_branch
          %174 = sbr.rel (%p172) target = $region28
        $region27: #{tpu_custom_call.1} parent=23 // pred_region
          %s175 = sand.u32 %s15, 1
          %s176 = scalar_lea.sflag [#allocation6], %s175
          %s177 = sand.u32 %s81, 1
          %s178 = smul.addr %s177, 128
          %s179 = scalar_lea.vmem [#allocation10], %s178
          %s180 = smul.u32 8, %s23
          %182 = vsyncadd %s176, 0
          %s183 = smul.addr %s180, 2
          %s184 = smul.addr %s22, 32
          %s185 = sadd.s32 %s183, %s184
          %s186 = smul.addr %s185, 8
          %s187 = scalar_lea.hbm %s2, %s186
          %s188 = sshll.u32 %s187, 4
          %s189 = int_to_ptr.hbm [resolvable:$true] %s188
          %s190 = sshll.u32 %s179, 4
          %s191 = int_to_ptr.vmem [resolvable:$true] %s190
          %196 = dma.hbm_to_vmem [thread:$0]  %s189, 2048, %s191, %s176, 128, 128, 8
        $region28: #{tpu_custom_call.1} parent=23 // pred_fallthru
          _
      $region24: #{tpu_custom_call.1} parent=5 // pred_fallthru
        _
      %p197 = scmp.le.s32.totalorder 1, %s15
      %p198 = scmp.lt.s32.totalorder %s15, 5
      %p199 = pnand %p197, %p198
      %p200 = pneg %p199
      // Predicated region
      $region29: #{tpu_custom_call.1} parent=5 // pred_check
        _
      $region30: #{tpu_custom_call.1} parent=5 // pred_check_branch
        %202 = sbr.rel (%p199) target = $region32
      $region31: #{tpu_custom_call.1} parent=5 // pred_region
        %s203 = ssub.s32 %s15, 1
        // Predicated region
        $region33: #{tpu_custom_call.1} parent=31 // pred_check
          %p204 = pneg %p48
        $region34: #{tpu_custom_call.1} parent=31 // pred_check_branch
          %206 = sbr.rel (%p204) target = $region36
        $region35: #{tpu_custom_call.1} parent=31 // pred_region
          %208 = dma.done [#allocation6], 256
        $region36: #{tpu_custom_call.1} parent=31 // pred_fallthru
          _
        // Predicated region
        $region37: #{tpu_custom_call.1} parent=31 // pred_check
          %p209 = pneg %p69
        $region38: #{tpu_custom_call.1} parent=31 // pred_check_branch
          %211 = sbr.rel (%p209) target = $region40
        $region39: #{tpu_custom_call.1} parent=31 // pred_region
          %213 = dma.done [#allocation9], 256
        $region40: #{tpu_custom_call.1} parent=31 // pred_fallthru
          _
        %s214 = sand.u32 %s20, 1
        %s215 = scalar_lea.sflag [#allocation6], %s214
        %s216 = sand.u32 %s84, 1
        %s217 = smul.addr %s216, 128
        %s218 = scalar_lea.vmem [#allocation10], %s217
        // Predicated region
        $region41: #{tpu_custom_call.1} parent=31 // pred_check
          %p219 = pneg %p97
        $region42: #{tpu_custom_call.1} parent=31 // pred_check_branch
          %221 = sbr.rel (%p219) target = $region44
        $region43: #{tpu_custom_call.1} parent=31 // pred_region
          %223 = dma.done %s215, 2048
        $region44: #{tpu_custom_call.1} parent=31 // pred_fallthru
          _
        %p224 = pneg %p48
        %p225 = pneg %p45
        %p226 = pneg %p69
        %p227 = pneg %p66
        %s228 = sand.u32 %s20, 1
        %s229 = scalar_lea.sflag [#allocation6], %s228
        %s230 = sand.u32 %s84, 1
        %s231 = smul.addr %s230, 128
        %s232 = scalar_lea.vmem [#allocation10], %s231
        %p233 = pneg %p97
        %p234 = pneg %p94
        %p235 = pneg %p125
        %p236 = pneg %p122
        %s237 = sand.u32 %s112, 1
        %s238 = scalar_lea.sflag [#allocation7], %s237
        %s239 = sand.u32 %s112, 1
        %s240 = smul.addr %s239, 128
        %s241 = scalar_lea.vmem [#allocation11], %s240
        %s242 = smul.u32 8, %s25
        %s243 = smul.u32 8, %s25
        %p244 = scmp.gt.s32.totalorder %s25, 0
        // Predicated region
        $region45: #{tpu_custom_call.1} parent=31 // pred_check
          %p245 = pneg %p244
        $region46: #{tpu_custom_call.1} parent=31 // pred_check_branch
          %247 = sbr.rel (%p245) target = $region48
        $region47: #{tpu_custom_call.1} parent=31 // pred_region
          %s248 = smul.u32 %s25, 8
          %s249 = ssub.s32 %s248, 3
          %s250 = smul.u32 %s249, 16
          %s251 = smul.u32 %s24, 256
          %s252 = sadd.s32 %s250, %s251
          %s253 = scalar_lea.hbm %s3, %s252
          // Predicated region
          $region49: #{tpu_custom_call.1} parent=47 // pred_check
            _
          $region50: #{tpu_custom_call.1} parent=47 // pred_check_branch
            %255 = sbr.rel target = $region52
          $region51: #{tpu_custom_call.1} parent=47 // pred_region
            %256 = sst [smem:[#allocation14]] [#allocation13]
            %257 = sst [smem:[#allocation15]] [#allocation12]
          $region52: #{tpu_custom_call.1} parent=47 // pred_fallthru
            _
          %259 = shalt.err (0)
          %s261 = sshll.u32 %s253, 4
          %s262 = int_to_ptr.hbm [resolvable:$true] %s261
          %s263 = sshll.u32 [#allocation2], 4
          %s264 = int_to_ptr.vmem [resolvable:$true] %s263
          %266 = dma.hbm_to_vmem [thread:$0]  %s262, 768, %s264, [#allocation4]
        $region48: #{tpu_custom_call.1} parent=31 // pred_fallthru
          _
        %p267 = scmp.lt.s32.totalorder %s25, 1
        // Predicated region
        $region53: #{tpu_custom_call.1} parent=31 // pred_check
          %p268 = pneg %p267
        $region54: #{tpu_custom_call.1} parent=31 // pred_check_branch
          %270 = sbr.rel (%p268) target = $region56
        $region55: #{tpu_custom_call.1} parent=31 // pred_region
          %s271 = smul.u32 %s25, 8
          %s272 = sadd.s32 %s271, 8
          %s273 = smul.u32 %s272, 16
          %s274 = smul.u32 %s24, 256
          %s275 = sadd.s32 %s273, %s274
          %s276 = scalar_lea.hbm %s3, %s275
          %s277 = scalar_lea.sflag [#allocation4], 1
          // Predicated region
          $region57: #{tpu_custom_call.1} parent=55 // pred_check
            _
          $region58: #{tpu_custom_call.1} parent=55 // pred_check_branch
            %279 = sbr.rel target = $region60
          $region59: #{tpu_custom_call.1} parent=55 // pred_region
            %280 = sst [smem:[#allocation14]] [#allocation17]
            %281 = sst [smem:[#allocation15]] [#allocation16]
          $region60: #{tpu_custom_call.1} parent=55 // pred_fallthru
            _
          %283 = shalt.err (0)
          %s285 = sshll.u32 %s276, 4
          %s286 = int_to_ptr.hbm [resolvable:$true] %s285
          %s287 = sshll.u32 [#allocation3], 4
          %s288 = int_to_ptr.vmem [resolvable:$true] %s287
          %290 = dma.hbm_to_vmem [thread:$0]  %s286, 768, %s288, %s277
        $region56: #{tpu_custom_call.1} parent=31 // pred_fallthru
          _
        %p291 = scmp.eq.s32.totalorder %s25, 0
        // Predicated region
        $region61: #{tpu_custom_call.1} parent=31 // pred_check
          %p292 = pneg %p291
        $region62: #{tpu_custom_call.1} parent=31 // pred_check_branch
          %294 = sbr.rel (%p292) target = $region64
        $region63: #{tpu_custom_call.1} parent=31 // pred_region
          %vm295 = vcmask 130048
          %296 = vst.msk [vmem:[#allocation2] sm:$0xff] %vm295, 0.0
          %297 = vst.msk [vmem:[#allocation2 + $0x8] sm:$0xff] %vm295, 0.0
          %298 = vst.msk [vmem:[#allocation2 + $0x10] sm:$0xff] %vm295, 0.0
          %299 = vst.msk [vmem:[#allocation2 + $0x18] sm:$0xff] %vm295, 0.0
          %300 = vst.msk [vmem:[#allocation2 + $0x20] sm:$0xff] %vm295, 0.0
          %301 = vst.msk [vmem:[#allocation2 + $0x28] sm:$0xff] %vm295, 0.0
        $region64: #{tpu_custom_call.1} parent=31 // pred_fallthru
          _
        %p302 = scmp.eq.s32.totalorder %s25, 1
        // Predicated region
        $region65: #{tpu_custom_call.1} parent=31 // pred_check
          %p303 = pneg %p302
        $region66: #{tpu_custom_call.1} parent=31 // pred_check_branch
          %305 = sbr.rel (%p303) target = $region68
        $region67: #{tpu_custom_call.1} parent=31 // pred_region
          %vm306 = vcmask 130048
          %307 = vst.msk [vmem:[#allocation3] sm:$0xff] %vm306, 0.0
          %308 = vst.msk [vmem:[#allocation3 + $0x8] sm:$0xff] %vm306, 0.0
          %309 = vst.msk [vmem:[#allocation3 + $0x10] sm:$0xff] %vm306, 0.0
          %310 = vst.msk [vmem:[#allocation3 + $0x18] sm:$0xff] %vm306, 0.0
          %311 = vst.msk [vmem:[#allocation3 + $0x20] sm:$0xff] %vm306, 0.0
          %312 = vst.msk [vmem:[#allocation3 + $0x28] sm:$0xff] %vm306, 0.0
        $region68: #{tpu_custom_call.1} parent=31 // pred_fallthru
          _
        %v313 = vld [vmem:[%s218] sm:$0xff]
        %v314 = vld [vmem:[%s218 + $0x8] sm:$0xff]
        %v315 = vmul.f32 %v313, 0.004565692
        %v316 = vmul.f32 %v314, 0.004565692
        %s317 = scalar_lea.vmem %s218, 16 [#allocation10]
        %v318 = vld [vmem:[%s317] sm:$0xff]
        %v319 = vld [vmem:[%s317 + $0x8] sm:$0xff]
        %v320 = vmul.f32 %v318, 0.053991128
        %v321 = vmul.f32 %v319, 0.053991128
        %v322 = vadd.f32 %v315, %v320
        %v323 = vadd.f32 %v316, %v321
        %s324 = scalar_lea.vmem %s218, 32 [#allocation10]
        %v325 = vld [vmem:[%s324] sm:$0xff]
        %v326 = vld [vmem:[%s324 + $0x8] sm:$0xff]
        %v327 = vmul.f32 %v325, 0.24197145
        %v328 = vmul.f32 %v326, 0.24197145
        %v329 = vadd.f32 %v322, %v327
        %v330 = vadd.f32 %v323, %v328
        %s331 = scalar_lea.vmem %s218, 48 [#allocation10]
        %v332 = vld [vmem:[%s331] sm:$0xff]
        %v333 = vld [vmem:[%s331 + $0x8] sm:$0xff]
        %v334 = vmul.f32 %v332, 0.39894348
        %v335 = vmul.f32 %v333, 0.39894348
        %v336 = vadd.f32 %v329, %v334
        %v337 = vadd.f32 %v330, %v335
        %s338 = scalar_lea.vmem %s218, 64 [#allocation10]
        %v339 = vld [vmem:[%s338] sm:$0xff]
        %v340 = vld [vmem:[%s338 + $0x8] sm:$0xff]
        %v341 = vmul.f32 %v339, 0.24197145
        %v342 = vmul.f32 %v340, 0.24197145
        %v343 = vadd.f32 %v336, %v341
        %v344 = vadd.f32 %v337, %v342
        %s345 = scalar_lea.vmem %s218, 80 [#allocation10]
        %v346 = vld [vmem:[%s345] sm:$0xff]
        %v347 = vld [vmem:[%s345 + $0x8] sm:$0xff]
        %v348 = vmul.f32 %v346, 0.053991128
        %v349 = vmul.f32 %v347, 0.053991128
        %v350 = vadd.f32 %v343, %v348
        %v351 = vadd.f32 %v344, %v349
        %s352 = scalar_lea.vmem %s218, 96 [#allocation10]
        %v353 = vld [vmem:[%s352] sm:$0xff]
        %v354 = vld [vmem:[%s352 + $0x8] sm:$0xff]
        %v355 = vmul.f32 %v353, 0.004565692
        %v356 = vmul.f32 %v354, 0.004565692
        %v357 = vadd.f32 %v350, %v355
        %v358 = vadd.f32 %v351, %v356
        %v359 = vld [vmem:[#allocation5] sm:$0xff]
        %v360 = vld [vmem:[#allocation5 + $0x8] sm:$0xff]
        %vm361 = vcmask 130048
        %v363 = vsel %vm361, %v359, 0
        %v366 = vsel %vm361, %v360, 0
        %368 = vmatpush.msra.mxu0 0.0
        %369 = vmatpush.msra.mxu0 0.0
        %370 = vmatpush.msra.mxu0 0.0
        %371 = vmatpush.msra.mxu0 0.0
        %372 = vmatpush.msra.mxu0 0.0
        %373 = vmatpush.msra.mxu0 0.0
        %374 = vmatpush.msra.mxu0 0.0
        %375 = vmatpush.msra.mxu0 0.0
        %376 = vmatpush.msra.mxu0 0.0
        %377 = vmatpush.msra.mxu0 0.0
        %378 = vmatpush.msra.mxu0 0.0
        %379 = vmatpush.msra.mxu0 0.0
        %380 = vmatpush.msra.mxu0 0.0
        %381 = vmatpush.msra.mxu0 0.0
        %382 = vmatpush.msra.mxu0 %v358
        %383 = vmatpush.msra.mxu0 %v357
        %384 = vmatmul.f32.gmra.mxu0 %v363
        %v385 = vpop.f32.mrf.mxu0
        %v386 = vadd.f32 0.0, %v385
        %387 = vmatmul.f32.gmra.mxu0 %v366
        %v388 = vpop.f32.mrf.mxu0
        %v389 = vadd.f32 0.0, %v388
        %390 = vdwg.mxu0
        %v391 = vld [vmem:[#allocation8] sm:$0xff]
        %v392 = vld [vmem:[#allocation8 + $0x8] sm:$0xff]
        %v394 = vsel %vm361, %v386, 0
        %v397 = vsel %vm361, %v389, 0
        %399 = vmatpush.msra.mxu0 0.0
        %400 = vmatpush.msra.mxu0 0.0
        %401 = vmatpush.msra.mxu0 0.0
        %402 = vmatpush.msra.mxu0 0.0
        %403 = vmatpush.msra.mxu0 0.0
        %404 = vmatpush.msra.mxu0 0.0
        %405 = vmatpush.msra.mxu0 0.0
        %406 = vmatpush.msra.mxu0 0.0
        %407 = vmatpush.msra.mxu0 0.0
        %408 = vmatpush.msra.mxu0 0.0
        %409 = vmatpush.msra.mxu0 0.0
        %410 = vmatpush.msra.mxu0 0.0
        %411 = vmatpush.msra.mxu0 0.0
        %412 = vmatpush.msra.mxu0 0.0
        %413 = vmatpush.msra.mxu0 %v392
        %414 = vmatpush.msra.mxu0 %v391
        %415 = vmatmul.f32.gmra.mxu0 %v394
        %v416 = vpop.f32.mrf.mxu0
        %v417 = vadd.f32 0.0, %v416
        %418 = vmatmul.f32.gmra.mxu0 %v397
        %v419 = vpop.f32.mrf.mxu0
        %v420 = vadd.f32 0.0, %v419
        %421 = vdwg.mxu0
        %s422 = scalar_lea.vmem %s241, 48 [#allocation11]
        %423 = vst.msk [vmem:[%s422] sm:$0xff] %vm361, %v417
        %424 = vst.msk [vmem:[%s422 + $0x8] sm:$0xff] %vm361, %v420
        %v425 = vld [vmem:[%s317] sm:$0xff]
        %v426 = vld [vmem:[%s317 + $0x8] sm:$0xff]
        %v427 = vmul.f32 %v425, 0.004565692
        %v428 = vmul.f32 %v426, 0.004565692
        %v429 = vld [vmem:[%s324] sm:$0xff]
        %v430 = vld [vmem:[%s324 + $0x8] sm:$0xff]
        %v431 = vmul.f32 %v429, 0.053991128
        %v432 = vmul.f32 %v430, 0.053991128
        %v433 = vadd.f32 %v427, %v431
        %v434 = vadd.f32 %v428, %v432
        %v435 = vld [vmem:[%s331] sm:$0xff]
        %v436 = vld [vmem:[%s331 + $0x8] sm:$0xff]
        %v437 = vmul.f32 %v435, 0.24197145
        %v438 = vmul.f32 %v436, 0.24197145
        %v439 = vadd.f32 %v433, %v437
        %v440 = vadd.f32 %v434, %v438
        %v441 = vld [vmem:[%s338] sm:$0xff]
        %v442 = vld [vmem:[%s338 + $0x8] sm:$0xff]
        %v443 = vmul.f32 %v441, 0.39894348
        %v444 = vmul.f32 %v442, 0.39894348
        %v445 = vadd.f32 %v439, %v443
        %v446 = vadd.f32 %v440, %v444
        %v447 = vld [vmem:[%s345] sm:$0xff]
        %v448 = vld [vmem:[%s345 + $0x8] sm:$0xff]
        %v449 = vmul.f32 %v447, 0.24197145
        %v450 = vmul.f32 %v448, 0.24197145
        %v451 = vadd.f32 %v445, %v449
        %v452 = vadd.f32 %v446, %v450
        %v453 = vld [vmem:[%s352] sm:$0xff]
        %v454 = vld [vmem:[%s352 + $0x8] sm:$0xff]
        %v455 = vmul.f32 %v453, 0.053991128
        %v456 = vmul.f32 %v454, 0.053991128
        %v457 = vadd.f32 %v451, %v455
        %v458 = vadd.f32 %v452, %v456
        %s459 = scalar_lea.vmem %s218, 112 [#allocation10]
        %v460 = vld [vmem:[%s459] sm:$0xff]
        %v461 = vld [vmem:[%s459 + $0x8] sm:$0xff]
        %v462 = vmul.f32 %v460, 0.004565692
        %v463 = vmul.f32 %v461, 0.004565692
        %v464 = vadd.f32 %v457, %v462
        %v465 = vadd.f32 %v458, %v463
        %v466 = vld [vmem:[#allocation5] sm:$0xff]
        %v467 = vld [vmem:[#allocation5 + $0x8] sm:$0xff]
        %v469 = vsel %vm361, %v466, 0
        %v472 = vsel %vm361, %v467, 0
        %474 = vmatpush.msra.mxu0 0.0
        %475 = vmatpush.msra.mxu0 0.0
        %476 = vmatpush.msra.mxu0 0.0
        %477 = vmatpush.msra.mxu0 0.0
        %478 = vmatpush.msra.mxu0 0.0
        %479 = vmatpush.msra.mxu0 0.0
        %480 = vmatpush.msra.mxu0 0.0
        %481 = vmatpush.msra.mxu0 0.0
        %482 = vmatpush.msra.mxu0 0.0
        %483 = vmatpush.msra.mxu0 0.0
        %484 = vmatpush.msra.mxu0 0.0
        %485 = vmatpush.msra.mxu0 0.0
        %486 = vmatpush.msra.mxu0 0.0
        %487 = vmatpush.msra.mxu0 0.0
        %488 = vmatpush.msra.mxu0 %v465
        %489 = vmatpush.msra.mxu0 %v464
        %490 = vmatmul.f32.gmra.mxu0 %v469
        %v491 = vpop.f32.mrf.mxu0
        %v492 = vadd.f32 0.0, %v491
        %493 = vmatmul.f32.gmra.mxu0 %v472
        %v494 = vpop.f32.mrf.mxu0
        %v495 = vadd.f32 0.0, %v494
        %496 = vdwg.mxu0
        %v497 = vld [vmem:[#allocation8] sm:$0xff]
        %v498 = vld [vmem:[#allocation8 + $0x8] sm:$0xff]
        %v500 = vsel %vm361, %v492, 0
        %v503 = vsel %vm361, %v495, 0
        %505 = vmatpush.msra.mxu0 0.0
        %506 = vmatpush.msra.mxu0 0.0
        %507 = vmatpush.msra.mxu0 0.0
        %508 = vmatpush.msra.mxu0 0.0
        %509 = vmatpush.msra.mxu0 0.0
        %510 = vmatpush.msra.mxu0 0.0
        %511 = vmatpush.msra.mxu0 0.0
        %512 = vmatpush.msra.mxu0 0.0
        %513 = vmatpush.msra.mxu0 0.0
        %514 = vmatpush.msra.mxu0 0.0
        %515 = vmatpush.msra.mxu0 0.0
        %516 = vmatpush.msra.mxu0 0.0
        %517 = vmatpush.msra.mxu0 0.0
        %518 = vmatpush.msra.mxu0 0.0
        %519 = vmatpush.msra.mxu0 %v498
        %520 = vmatpush.msra.mxu0 %v497
        %521 = vmatmul.f32.gmra.mxu0 %v500
        %v522 = vpop.f32.mrf.mxu0
        %v523 = vadd.f32 0.0, %v522
        %524 = vmatmul.f32.gmra.mxu0 %v503
        %v525 = vpop.f32.mrf.mxu0
        %v526 = vadd.f32 0.0, %v525
        %527 = vdwg.mxu0
        %s528 = scalar_lea.vmem %s241, 64 [#allocation11]
        %529 = vst.msk [vmem:[%s528] sm:$0xff] %vm361, %v523
        %530 = vst.msk [vmem:[%s528 + $0x8] sm:$0xff] %vm361, %v526
        // Predicated region
        $region69: #{tpu_custom_call.1} parent=31 // pred_check
          %p531 = pneg %p244
        $region70: #{tpu_custom_call.1} parent=31 // pred_check_branch
          %533 = sbr.rel (%p531) target = $region72
        $region71: #{tpu_custom_call.1} parent=31 // pred_region
          %s534 = smul.u32 3, 16
          %s535 = smul.u32 %s534, 1
          %s536 = sshll.u32 %s535, 4
          %537 = dma.done [#allocation4], %s536
        $region72: #{tpu_custom_call.1} parent=31 // pred_fallthru
          _
        // Predicated region
        $region73: #{tpu_custom_call.1} parent=31 // pred_check
          %p538 = pneg %p267
        $region74: #{tpu_custom_call.1} parent=31 // pred_check_branch
          %540 = sbr.rel (%p538) target = $region76
        $region75: #{tpu_custom_call.1} parent=31 // pred_region
          %s541 = scalar_lea.sflag [#allocation4], 1
          %s542 = smul.u32 3, 16
          %s543 = smul.u32 %s542, 1
          %s544 = sshll.u32 %s543, 4
          %545 = dma.done %s541, %s544
        $region76: #{tpu_custom_call.1} parent=31 // pred_fallthru
          _
        %v546 = vld [vmem:[#allocation2] sm:$0xff]
        %v547 = vld [vmem:[#allocation2 + $0x8] sm:$0xff]
        %v548 = vmul.f32 %v546, 0.004565692
        %v549 = vmul.f32 %v547, 0.004565692
        %s550 = scalar_lea.vmem [#allocation2], 16
        %v551 = vld [vmem:[%s550] sm:$0xff]
        %v552 = vld [vmem:[%s550 + $0x8] sm:$0xff]
        %v553 = vmul.f32 %v551, 0.053991128
        %v554 = vmul.f32 %v552, 0.053991128
        %v555 = vadd.f32 %v548, %v553
        %v556 = vadd.f32 %v549, %v554
        %s557 = scalar_lea.vmem [#allocation2], 32
        %v558 = vld [vmem:[%s557] sm:$0xff]
        %v559 = vld [vmem:[%s557 + $0x8] sm:$0xff]
        %v560 = vmul.f32 %v558, 0.24197145
        %v561 = vmul.f32 %v559, 0.24197145
        %v562 = vadd.f32 %v555, %v560
        %v563 = vadd.f32 %v556, %v561
        %v564 = vld [vmem:[%s218] sm:$0xff]
        %v565 = vld [vmem:[%s218 + $0x8] sm:$0xff]
        %v566 = vmul.f32 %v564, 0.39894348
        %v567 = vmul.f32 %v565, 0.39894348
        %v568 = vadd.f32 %v562, %v566
        %v569 = vadd.f32 %v563, %v567
        %v570 = vld [vmem:[%s317] sm:$0xff]
        %v571 = vld [vmem:[%s317 + $0x8] sm:$0xff]
        %v572 = vmul.f32 %v570, 0.24197145
        %v573 = vmul.f32 %v571, 0.24197145
        %v574 = vadd.f32 %v568, %v572
        %v575 = vadd.f32 %v569, %v573
        %v576 = vld [vmem:[%s324] sm:$0xff]
        %v577 = vld [vmem:[%s324 + $0x8] sm:$0xff]
        %v578 = vmul.f32 %v576, 0.053991128
        %v579 = vmul.f32 %v577, 0.053991128
        %v580 = vadd.f32 %v574, %v578
        %v581 = vadd.f32 %v575, %v579
        %v582 = vld [vmem:[%s331] sm:$0xff]
        %v583 = vld [vmem:[%s331 + $0x8] sm:$0xff]
        %v584 = vmul.f32 %v582, 0.004565692
        %v585 = vmul.f32 %v583, 0.004565692
        %v586 = vadd.f32 %v580, %v584
        %v587 = vadd.f32 %v581, %v585
        %v588 = vld [vmem:[#allocation5] sm:$0xff]
        %v589 = vld [vmem:[#allocation5 + $0x8] sm:$0xff]
        %v591 = vsel %vm361, %v588, 0
        %v594 = vsel %vm361, %v589, 0
        %596 = vmatpush.msra.mxu0 0.0
        %597 = vmatpush.msra.mxu0 0.0
        %598 = vmatpush.msra.mxu0 0.0
        %599 = vmatpush.msra.mxu0 0.0
        %600 = vmatpush.msra.mxu0 0.0
        %601 = vmatpush.msra.mxu0 0.0
        %602 = vmatpush.msra.mxu0 0.0
        %603 = vmatpush.msra.mxu0 0.0
        %604 = vmatpush.msra.mxu0 0.0
        %605 = vmatpush.msra.mxu0 0.0
        %606 = vmatpush.msra.mxu0 0.0
        %607 = vmatpush.msra.mxu0 0.0
        %608 = vmatpush.msra.mxu0 0.0
        %609 = vmatpush.msra.mxu0 0.0
        %610 = vmatpush.msra.mxu0 %v587
        %611 = vmatpush.msra.mxu0 %v586
        %612 = vmatmul.f32.gmra.mxu0 %v591
        %v613 = vpop.f32.mrf.mxu0
        %v614 = vadd.f32 0.0, %v613
        %615 = vmatmul.f32.gmra.mxu0 %v594
        %v616 = vpop.f32.mrf.mxu0
        %v617 = vadd.f32 0.0, %v616
        %618 = vdwg.mxu0
        %v619 = vld [vmem:[#allocation8] sm:$0xff]
        %v620 = vld [vmem:[#allocation8 + $0x8] sm:$0xff]
        %v622 = vsel %vm361, %v614, 0
        %v625 = vsel %vm361, %v617, 0
        %627 = vmatpush.msra.mxu0 0.0
        %628 = vmatpush.msra.mxu0 0.0
        %629 = vmatpush.msra.mxu0 0.0
        %630 = vmatpush.msra.mxu0 0.0
        %631 = vmatpush.msra.mxu0 0.0
        %632 = vmatpush.msra.mxu0 0.0
        %633 = vmatpush.msra.mxu0 0.0
        %634 = vmatpush.msra.mxu0 0.0
        %635 = vmatpush.msra.mxu0 0.0
        %636 = vmatpush.msra.mxu0 0.0
        %637 = vmatpush.msra.mxu0 0.0
        %638 = vmatpush.msra.mxu0 0.0
        %639 = vmatpush.msra.mxu0 0.0
        %640 = vmatpush.msra.mxu0 0.0
        %641 = vmatpush.msra.mxu0 %v620
        %642 = vmatpush.msra.mxu0 %v619
        %643 = vmatmul.f32.gmra.mxu0 %v622
        %v644 = vpop.f32.mrf.mxu0
        %v645 = vadd.f32 0.0, %v644
        %646 = vmatmul.f32.gmra.mxu0 %v625
        %v647 = vpop.f32.mrf.mxu0
        %v648 = vadd.f32 0.0, %v647
        %649 = vdwg.mxu0
        %650 = vst.msk [vmem:[%s241] sm:$0xff] %vm361, %v645
        %651 = vst.msk [vmem:[%s241 + $0x8] sm:$0xff] %vm361, %v648
        %v652 = vld [vmem:[%s550] sm:$0xff]
        %v653 = vld [vmem:[%s550 + $0x8] sm:$0xff]
        %v654 = vmul.f32 %v652, 0.004565692
        %v655 = vmul.f32 %v653, 0.004565692
        %v656 = vld [vmem:[%s557] sm:$0xff]
        %v657 = vld [vmem:[%s557 + $0x8] sm:$0xff]
        %v658 = vmul.f32 %v656, 0.053991128
        %v659 = vmul.f32 %v657, 0.053991128
        %v660 = vadd.f32 %v654, %v658
        %v661 = vadd.f32 %v655, %v659
        %v662 = vld [vmem:[%s218] sm:$0xff]
        %v663 = vld [vmem:[%s218 + $0x8] sm:$0xff]
        %v664 = vmul.f32 %v662, 0.24197145
        %v665 = vmul.f32 %v663, 0.24197145
        %v666 = vadd.f32 %v660, %v664
        %v667 = vadd.f32 %v661, %v665
        %v668 = vld [vmem:[%s317] sm:$0xff]
        %v669 = vld [vmem:[%s317 + $0x8] sm:$0xff]
        %v670 = vmul.f32 %v668, 0.39894348
        %v671 = vmul.f32 %v669, 0.39894348
        %v672 = vadd.f32 %v666, %v670
        %v673 = vadd.f32 %v667, %v671
        %v674 = vld [vmem:[%s324] sm:$0xff]
        %v675 = vld [vmem:[%s324 + $0x8] sm:$0xff]
        %v676 = vmul.f32 %v674, 0.24197145
        %v677 = vmul.f32 %v675, 0.24197145
        %v678 = vadd.f32 %v672, %v676
        %v679 = vadd.f32 %v673, %v677
        %v680 = vld [vmem:[%s331] sm:$0xff]
        %v681 = vld [vmem:[%s331 + $0x8] sm:$0xff]
        %v682 = vmul.f32 %v680, 0.053991128
        %v683 = vmul.f32 %v681, 0.053991128
        %v684 = vadd.f32 %v678, %v682
        %v685 = vadd.f32 %v679, %v683
        %v686 = vld [vmem:[%s338] sm:$0xff]
        %v687 = vld [vmem:[%s338 + $0x8] sm:$0xff]
        %v688 = vmul.f32 %v686, 0.004565692
        %v689 = vmul.f32 %v687, 0.004565692
        %v690 = vadd.f32 %v684, %v688
        %v691 = vadd.f32 %v685, %v689
        %v692 = vld [vmem:[#allocation5] sm:$0xff]
        %v693 = vld [vmem:[#allocation5 + $0x8] sm:$0xff]
        %v695 = vsel %vm361, %v692, 0
        %v698 = vsel %vm361, %v693, 0
        %700 = vmatpush.msra.mxu0 0.0
        %701 = vmatpush.msra.mxu0 0.0
        %702 = vmatpush.msra.mxu0 0.0
        %703 = vmatpush.msra.mxu0 0.0
        %704 = vmatpush.msra.mxu0 0.0
        %705 = vmatpush.msra.mxu0 0.0
        %706 = vmatpush.msra.mxu0 0.0
        %707 = vmatpush.msra.mxu0 0.0
        %708 = vmatpush.msra.mxu0 0.0
        %709 = vmatpush.msra.mxu0 0.0
        %710 = vmatpush.msra.mxu0 0.0
        %711 = vmatpush.msra.mxu0 0.0
        %712 = vmatpush.msra.mxu0 0.0
        %713 = vmatpush.msra.mxu0 0.0
        %714 = vmatpush.msra.mxu0 %v691
        %715 = vmatpush.msra.mxu0 %v690
        %716 = vmatmul.f32.gmra.mxu0 %v695
        %v717 = vpop.f32.mrf.mxu0
        %v718 = vadd.f32 0.0, %v717
        %719 = vmatmul.f32.gmra.mxu0 %v698
        %v720 = vpop.f32.mrf.mxu0
        %v721 = vadd.f32 0.0, %v720
        %722 = vdwg.mxu0
        %v723 = vld [vmem:[#allocation8] sm:$0xff]
        %v724 = vld [vmem:[#allocation8 + $0x8] sm:$0xff]
        %v726 = vsel %vm361, %v718, 0
        %v729 = vsel %vm361, %v721, 0
        %731 = vmatpush.msra.mxu0 0.0
        %732 = vmatpush.msra.mxu0 0.0
        %733 = vmatpush.msra.mxu0 0.0
        %734 = vmatpush.msra.mxu0 0.0
        %735 = vmatpush.msra.mxu0 0.0
        %736 = vmatpush.msra.mxu0 0.0
        %737 = vmatpush.msra.mxu0 0.0
        %738 = vmatpush.msra.mxu0 0.0
        %739 = vmatpush.msra.mxu0 0.0
        %740 = vmatpush.msra.mxu0 0.0
        %741 = vmatpush.msra.mxu0 0.0
        %742 = vmatpush.msra.mxu0 0.0
        %743 = vmatpush.msra.mxu0 0.0
        %744 = vmatpush.msra.mxu0 0.0
        %745 = vmatpush.msra.mxu0 %v724
        %746 = vmatpush.msra.mxu0 %v723
        %747 = vmatmul.f32.gmra.mxu0 %v726
        %v748 = vpop.f32.mrf.mxu0
        %v749 = vadd.f32 0.0, %v748
        %750 = vmatmul.f32.gmra.mxu0 %v729
        %v751 = vpop.f32.mrf.mxu0
        %v752 = vadd.f32 0.0, %v751
        %753 = vdwg.mxu0
        %s754 = scalar_lea.vmem %s241, 16 [#allocation11]
        %755 = vst.msk [vmem:[%s754] sm:$0xff] %vm361, %v749
        %756 = vst.msk [vmem:[%s754 + $0x8] sm:$0xff] %vm361, %v752
        %v757 = vld [vmem:[%s557] sm:$0xff]
        %v758 = vld [vmem:[%s557 + $0x8] sm:$0xff]
        %v759 = vmul.f32 %v757, 0.004565692
        %v760 = vmul.f32 %v758, 0.004565692
        %v761 = vld [vmem:[%s218] sm:$0xff]
        %v762 = vld [vmem:[%s218 + $0x8] sm:$0xff]
        %v763 = vmul.f32 %v761, 0.053991128
        %v764 = vmul.f32 %v762, 0.053991128
        %v765 = vadd.f32 %v759, %v763
        %v766 = vadd.f32 %v760, %v764
        %v767 = vld [vmem:[%s317] sm:$0xff]
        %v768 = vld [vmem:[%s317 + $0x8] sm:$0xff]
        %v769 = vmul.f32 %v767, 0.24197145
        %v770 = vmul.f32 %v768, 0.24197145
        %v771 = vadd.f32 %v765, %v769
        %v772 = vadd.f32 %v766, %v770
        %v773 = vld [vmem:[%s324] sm:$0xff]
        %v774 = vld [vmem:[%s324 + $0x8] sm:$0xff]
        %v775 = vmul.f32 %v773, 0.39894348
        %v776 = vmul.f32 %v774, 0.39894348
        %v777 = vadd.f32 %v771, %v775
        %v778 = vadd.f32 %v772, %v776
        %v779 = vld [vmem:[%s331] sm:$0xff]
        %v780 = vld [vmem:[%s331 + $0x8] sm:$0xff]
        %v781 = vmul.f32 %v779, 0.24197145
        %v782 = vmul.f32 %v780, 0.24197145
        %v783 = vadd.f32 %v777, %v781
        %v784 = vadd.f32 %v778, %v782
        %v785 = vld [vmem:[%s338] sm:$0xff]
        %v786 = vld [vmem:[%s338 + $0x8] sm:$0xff]
        %v787 = vmul.f32 %v785, 0.053991128
        %v788 = vmul.f32 %v786, 0.053991128
        %v789 = vadd.f32 %v783, %v787
        %v790 = vadd.f32 %v784, %v788
        %v791 = vld [vmem:[%s345] sm:$0xff]
        %v792 = vld [vmem:[%s345 + $0x8] sm:$0xff]
        %v793 = vmul.f32 %v791, 0.004565692
        %v794 = vmul.f32 %v792, 0.004565692
        %v795 = vadd.f32 %v789, %v793
        %v796 = vadd.f32 %v790, %v794
        %v797 = vld [vmem:[#allocation5] sm:$0xff]
        %v798 = vld [vmem:[#allocation5 + $0x8] sm:$0xff]
        %v800 = vsel %vm361, %v797, 0
        %v803 = vsel %vm361, %v798, 0
        %805 = vmatpush.msra.mxu0 0.0
        %806 = vmatpush.msra.mxu0 0.0
        %807 = vmatpush.msra.mxu0 0.0
        %808 = vmatpush.msra.mxu0 0.0
        %809 = vmatpush.msra.mxu0 0.0
        %810 = vmatpush.msra.mxu0 0.0
        %811 = vmatpush.msra.mxu0 0.0
        %812 = vmatpush.msra.mxu0 0.0
        %813 = vmatpush.msra.mxu0 0.0
        %814 = vmatpush.msra.mxu0 0.0
        %815 = vmatpush.msra.mxu0 0.0
        %816 = vmatpush.msra.mxu0 0.0
        %817 = vmatpush.msra.mxu0 0.0
        %818 = vmatpush.msra.mxu0 0.0
        %819 = vmatpush.msra.mxu0 %v796
        %820 = vmatpush.msra.mxu0 %v795
        %821 = vmatmul.f32.gmra.mxu0 %v800
        %v822 = vpop.f32.mrf.mxu0
        %v823 = vadd.f32 0.0, %v822
        %824 = vmatmul.f32.gmra.mxu0 %v803
        %v825 = vpop.f32.mrf.mxu0
        %v826 = vadd.f32 0.0, %v825
        %827 = vdwg.mxu0
        %v828 = vld [vmem:[#allocation8] sm:$0xff]
        %v829 = vld [vmem:[#allocation8 + $0x8] sm:$0xff]
        %v831 = vsel %vm361, %v823, 0
        %v834 = vsel %vm361, %v826, 0
        %836 = vmatpush.msra.mxu0 0.0
        %837 = vmatpush.msra.mxu0 0.0
        %838 = vmatpush.msra.mxu0 0.0
        %839 = vmatpush.msra.mxu0 0.0
        %840 = vmatpush.msra.mxu0 0.0
        %841 = vmatpush.msra.mxu0 0.0
        %842 = vmatpush.msra.mxu0 0.0
        %843 = vmatpush.msra.mxu0 0.0
        %844 = vmatpush.msra.mxu0 0.0
        %845 = vmatpush.msra.mxu0 0.0
        %846 = vmatpush.msra.mxu0 0.0
        %847 = vmatpush.msra.mxu0 0.0
        %848 = vmatpush.msra.mxu0 0.0
        %849 = vmatpush.msra.mxu0 0.0
        %850 = vmatpush.msra.mxu0 %v829
        %851 = vmatpush.msra.mxu0 %v828
        %852 = vmatmul.f32.gmra.mxu0 %v831
        %v853 = vpop.f32.mrf.mxu0
        %v854 = vadd.f32 0.0, %v853
        %855 = vmatmul.f32.gmra.mxu0 %v834
        %v856 = vpop.f32.mrf.mxu0
        %v857 = vadd.f32 0.0, %v856
        %858 = vdwg.mxu0
        %s859 = scalar_lea.vmem %s241, 32 [#allocation11]
        %860 = vst.msk [vmem:[%s859] sm:$0xff] %vm361, %v854
        %861 = vst.msk [vmem:[%s859 + $0x8] sm:$0xff] %vm361, %v857
        %v862 = vld [vmem:[%s324] sm:$0xff]
        %v863 = vld [vmem:[%s324 + $0x8] sm:$0xff]
        %v864 = vmul.f32 %v862, 0.004565692
        %v865 = vmul.f32 %v863, 0.004565692
        %v866 = vld [vmem:[%s331] sm:$0xff]
        %v867 = vld [vmem:[%s331 + $0x8] sm:$0xff]
        %v868 = vmul.f32 %v866, 0.053991128
        %v869 = vmul.f32 %v867, 0.053991128
        %v870 = vadd.f32 %v864, %v868
        %v871 = vadd.f32 %v865, %v869
        %v872 = vld [vmem:[%s338] sm:$0xff]
        %v873 = vld [vmem:[%s338 + $0x8] sm:$0xff]
        %v874 = vmul.f32 %v872, 0.24197145
        %v875 = vmul.f32 %v873, 0.24197145
        %v876 = vadd.f32 %v870, %v874
        %v877 = vadd.f32 %v871, %v875
        %v878 = vld [vmem:[%s345] sm:$0xff]
        %v879 = vld [vmem:[%s345 + $0x8] sm:$0xff]
        %v880 = vmul.f32 %v878, 0.39894348
        %v881 = vmul.f32 %v879, 0.39894348
        %v882 = vadd.f32 %v876, %v880
        %v883 = vadd.f32 %v877, %v881
        %v884 = vld [vmem:[%s352] sm:$0xff]
        %v885 = vld [vmem:[%s352 + $0x8] sm:$0xff]
        %v886 = vmul.f32 %v884, 0.24197145
        %v887 = vmul.f32 %v885, 0.24197145
        %v888 = vadd.f32 %v882, %v886
        %v889 = vadd.f32 %v883, %v887
        %v890 = vld [vmem:[%s459] sm:$0xff]
        %v891 = vld [vmem:[%s459 + $0x8] sm:$0xff]
        %v892 = vmul.f32 %v890, 0.053991128
        %v893 = vmul.f32 %v891, 0.053991128
        %v894 = vadd.f32 %v888, %v892
        %v895 = vadd.f32 %v889, %v893
        %v896 = vld [vmem:[#allocation3] sm:$0xff]
        %v897 = vld [vmem:[#allocation3 + $0x8] sm:$0xff]
        %v898 = vmul.f32 %v896, 0.004565692
        %v899 = vmul.f32 %v897, 0.004565692
        %v900 = vadd.f32 %v894, %v898
        %v901 = vadd.f32 %v895, %v899
        %v902 = vld [vmem:[#allocation5] sm:$0xff]
        %v903 = vld [vmem:[#allocation5 + $0x8] sm:$0xff]
        %v905 = vsel %vm361, %v902, 0
        %v908 = vsel %vm361, %v903, 0
        %910 = vmatpush.msra.mxu0 0.0
        %911 = vmatpush.msra.mxu0 0.0
        %912 = vmatpush.msra.mxu0 0.0
        %913 = vmatpush.msra.mxu0 0.0
        %914 = vmatpush.msra.mxu0 0.0
        %915 = vmatpush.msra.mxu0 0.0
        %916 = vmatpush.msra.mxu0 0.0
        %917 = vmatpush.msra.mxu0 0.0
        %918 = vmatpush.msra.mxu0 0.0
        %919 = vmatpush.msra.mxu0 0.0
        %920 = vmatpush.msra.mxu0 0.0
        %921 = vmatpush.msra.mxu0 0.0
        %922 = vmatpush.msra.mxu0 0.0
        %923 = vmatpush.msra.mxu0 0.0
        %924 = vmatpush.msra.mxu0 %v901
        %925 = vmatpush.msra.mxu0 %v900
        %926 = vmatmul.f32.gmra.mxu0 %v905
        %v927 = vpop.f32.mrf.mxu0
        %v928 = vadd.f32 0.0, %v927
        %929 = vmatmul.f32.gmra.mxu0 %v908
        %v930 = vpop.f32.mrf.mxu0
        %v931 = vadd.f32 0.0, %v930
        %932 = vdwg.mxu0
        %v933 = vld [vmem:[#allocation8] sm:$0xff]
        %v934 = vld [vmem:[#allocation8 + $0x8] sm:$0xff]
        %v936 = vsel %vm361, %v928, 0
        %v939 = vsel %vm361, %v931, 0
        %941 = vmatpush.msra.mxu0 0.0
        %942 = vmatpush.msra.mxu0 0.0
        %943 = vmatpush.msra.mxu0 0.0
        %944 = vmatpush.msra.mxu0 0.0
        %945 = vmatpush.msra.mxu0 0.0
        %946 = vmatpush.msra.mxu0 0.0
        %947 = vmatpush.msra.mxu0 0.0
        %948 = vmatpush.msra.mxu0 0.0
        %949 = vmatpush.msra.mxu0 0.0
        %950 = vmatpush.msra.mxu0 0.0
        %951 = vmatpush.msra.mxu0 0.0
        %952 = vmatpush.msra.mxu0 0.0
        %953 = vmatpush.msra.mxu0 0.0
        %954 = vmatpush.msra.mxu0 0.0
        %955 = vmatpush.msra.mxu0 %v934
        %956 = vmatpush.msra.mxu0 %v933
        %957 = vmatmul.f32.gmra.mxu0 %v936
        %v958 = vpop.f32.mrf.mxu0
        %v959 = vadd.f32 0.0, %v958
        %960 = vmatmul.f32.gmra.mxu0 %v939
        %v961 = vpop.f32.mrf.mxu0
        %v962 = vadd.f32 0.0, %v961
        %963 = vdwg.mxu0
        %s964 = scalar_lea.vmem %s241, 80 [#allocation11]
        %965 = vst.msk [vmem:[%s964] sm:$0xff] %vm361, %v959
        %966 = vst.msk [vmem:[%s964 + $0x8] sm:$0xff] %vm361, %v962
        %v967 = vld [vmem:[%s331] sm:$0xff]
        %v968 = vld [vmem:[%s331 + $0x8] sm:$0xff]
        %v969 = vmul.f32 %v967, 0.004565692
        %v970 = vmul.f32 %v968, 0.004565692
        %v971 = vld [vmem:[%s338] sm:$0xff]
        %v972 = vld [vmem:[%s338 + $0x8] sm:$0xff]
        %v973 = vmul.f32 %v971, 0.053991128
        %v974 = vmul.f32 %v972, 0.053991128
        %v975 = vadd.f32 %v969, %v973
        %v976 = vadd.f32 %v970, %v974
        %v977 = vld [vmem:[%s345] sm:$0xff]
        %v978 = vld [vmem:[%s345 + $0x8] sm:$0xff]
        %v979 = vmul.f32 %v977, 0.24197145
        %v980 = vmul.f32 %v978, 0.24197145
        %v981 = vadd.f32 %v975, %v979
        %v982 = vadd.f32 %v976, %v980
        %v983 = vld [vmem:[%s352] sm:$0xff]
        %v984 = vld [vmem:[%s352 + $0x8] sm:$0xff]
        %v985 = vmul.f32 %v983, 0.39894348
        %v986 = vmul.f32 %v984, 0.39894348
        %v987 = vadd.f32 %v981, %v985
        %v988 = vadd.f32 %v982, %v986
        %v989 = vld [vmem:[%s459] sm:$0xff]
        %v990 = vld [vmem:[%s459 + $0x8] sm:$0xff]
        %v991 = vmul.f32 %v989, 0.24197145
        %v992 = vmul.f32 %v990, 0.24197145
        %v993 = vadd.f32 %v987, %v991
        %v994 = vadd.f32 %v988, %v992
        %v995 = vld [vmem:[#allocation3] sm:$0xff]
        %v996 = vld [vmem:[#allocation3 + $0x8] sm:$0xff]
        %v997 = vmul.f32 %v995, 0.053991128
        %v998 = vmul.f32 %v996, 0.053991128
        %v999 = vadd.f32 %v993, %v997
        %v1000 = vadd.f32 %v994, %v998
        %s1001 = scalar_lea.vmem [#allocation3], 16
        %v1002 = vld [vmem:[%s1001] sm:$0xff]
        %v1003 = vld [vmem:[%s1001 + $0x8] sm:$0xff]
        %v1004 = vmul.f32 %v1002, 0.004565692
        %v1005 = vmul.f32 %v1003, 0.004565692
        %v1006 = vadd.f32 %v999, %v1004
        %v1007 = vadd.f32 %v1000, %v1005
        %v1008 = vld [vmem:[#allocation5] sm:$0xff]
        %v1009 = vld [vmem:[#allocation5 + $0x8] sm:$0xff]
        %v1011 = vsel %vm361, %v1008, 0
        %v1014 = vsel %vm361, %v1009, 0
        %1016 = vmatpush.msra.mxu0 0.0
        %1017 = vmatpush.msra.mxu0 0.0
        %1018 = vmatpush.msra.mxu0 0.0
        %1019 = vmatpush.msra.mxu0 0.0
        %1020 = vmatpush.msra.mxu0 0.0
        %1021 = vmatpush.msra.mxu0 0.0
        %1022 = vmatpush.msra.mxu0 0.0
        %1023 = vmatpush.msra.mxu0 0.0
        %1024 = vmatpush.msra.mxu0 0.0
        %1025 = vmatpush.msra.mxu0 0.0
        %1026 = vmatpush.msra.mxu0 0.0
        %1027 = vmatpush.msra.mxu0 0.0
        %1028 = vmatpush.msra.mxu0 0.0
        %1029 = vmatpush.msra.mxu0 0.0
        %1030 = vmatpush.msra.mxu0 %v1007
        %1031 = vmatpush.msra.mxu0 %v1006
        %1032 = vmatmul.f32.gmra.mxu0 %v1011
        %v1033 = vpop.f32.mrf.mxu0
        %v1034 = vadd.f32 0.0, %v1033
        %1035 = vmatmul.f32.gmra.mxu0 %v1014
        %v1036 = vpop.f32.mrf.mxu0
        %v1037 = vadd.f32 0.0, %v1036
        %1038 = vdwg.mxu0
        %v1039 = vld [vmem:[#allocation8] sm:$0xff]
        %v1040 = vld [vmem:[#allocation8 + $0x8] sm:$0xff]
        %v1042 = vsel %vm361, %v1034, 0
        %v1045 = vsel %vm361, %v1037, 0
        %1047 = vmatpush.msra.mxu0 0.0
        %1048 = vmatpush.msra.mxu0 0.0
        %1049 = vmatpush.msra.mxu0 0.0
        %1050 = vmatpush.msra.mxu0 0.0
        %1051 = vmatpush.msra.mxu0 0.0
        %1052 = vmatpush.msra.mxu0 0.0
        %1053 = vmatpush.msra.mxu0 0.0
        %1054 = vmatpush.msra.mxu0 0.0
        %1055 = vmatpush.msra.mxu0 0.0
        %1056 = vmatpush.msra.mxu0 0.0
        %1057 = vmatpush.msra.mxu0 0.0
        %1058 = vmatpush.msra.mxu0 0.0
        %1059 = vmatpush.msra.mxu0 0.0
        %1060 = vmatpush.msra.mxu0 0.0
        %1061 = vmatpush.msra.mxu0 %v1040
        %1062 = vmatpush.msra.mxu0 %v1039
        %1063 = vmatmul.f32.gmra.mxu0 %v1042
        %v1064 = vpop.f32.mrf.mxu0
        %v1065 = vadd.f32 0.0, %v1064
        %1066 = vmatmul.f32.gmra.mxu0 %v1045
        %v1067 = vpop.f32.mrf.mxu0
        %v1068 = vadd.f32 0.0, %v1067
        %1069 = vdwg.mxu0
        %s1070 = scalar_lea.vmem %s241, 96 [#allocation11]
        %1071 = vst.msk [vmem:[%s1070] sm:$0xff] %vm361, %v1065
        %1072 = vst.msk [vmem:[%s1070 + $0x8] sm:$0xff] %vm361, %v1068
        %v1073 = vld [vmem:[%s338] sm:$0xff]
        %v1074 = vld [vmem:[%s338 + $0x8] sm:$0xff]
        %v1075 = vmul.f32 %v1073, 0.004565692
        %v1076 = vmul.f32 %v1074, 0.004565692
        %v1077 = vld [vmem:[%s345] sm:$0xff]
        %v1078 = vld [vmem:[%s345 + $0x8] sm:$0xff]
        %v1079 = vmul.f32 %v1077, 0.053991128
        %v1080 = vmul.f32 %v1078, 0.053991128
        %v1081 = vadd.f32 %v1075, %v1079
        %v1082 = vadd.f32 %v1076, %v1080
        %v1083 = vld [vmem:[%s352] sm:$0xff]
        %v1084 = vld [vmem:[%s352 + $0x8] sm:$0xff]
        %v1085 = vmul.f32 %v1083, 0.24197145
        %v1086 = vmul.f32 %v1084, 0.24197145
        %v1087 = vadd.f32 %v1081, %v1085
        %v1088 = vadd.f32 %v1082, %v1086
        %v1089 = vld [vmem:[%s459] sm:$0xff]
        %v1090 = vld [vmem:[%s459 + $0x8] sm:$0xff]
        %v1091 = vmul.f32 %v1089, 0.39894348
        %v1092 = vmul.f32 %v1090, 0.39894348
        %v1093 = vadd.f32 %v1087, %v1091
        %v1094 = vadd.f32 %v1088, %v1092
        %v1095 = vld [vmem:[#allocation3] sm:$0xff]
        %v1096 = vld [vmem:[#allocation3 + $0x8] sm:$0xff]
        %v1097 = vmul.f32 %v1095, 0.24197145
        %v1098 = vmul.f32 %v1096, 0.24197145
        %v1099 = vadd.f32 %v1093, %v1097
        %v1100 = vadd.f32 %v1094, %v1098
        %v1101 = vld [vmem:[%s1001] sm:$0xff]
        %v1102 = vld [vmem:[%s1001 + $0x8] sm:$0xff]
        %v1103 = vmul.f32 %v1101, 0.053991128
        %v1104 = vmul.f32 %v1102, 0.053991128
        %v1105 = vadd.f32 %v1099, %v1103
        %v1106 = vadd.f32 %v1100, %v1104
        %s1107 = scalar_lea.vmem [#allocation3], 32
        %v1108 = vld [vmem:[%s1107] sm:$0xff]
        %v1109 = vld [vmem:[%s1107 + $0x8] sm:$0xff]
        %v1110 = vmul.f32 %v1108, 0.004565692
        %v1111 = vmul.f32 %v1109, 0.004565692
        %v1112 = vadd.f32 %v1105, %v1110
        %v1113 = vadd.f32 %v1106, %v1111
        %v1114 = vld [vmem:[#allocation5] sm:$0xff]
        %v1115 = vld [vmem:[#allocation5 + $0x8] sm:$0xff]
        %v1117 = vsel %vm361, %v1114, 0
        %v1120 = vsel %vm361, %v1115, 0
        %1122 = vmatpush.msra.mxu0 0.0
        %1123 = vmatpush.msra.mxu0 0.0
        %1124 = vmatpush.msra.mxu0 0.0
        %1125 = vmatpush.msra.mxu0 0.0
        %1126 = vmatpush.msra.mxu0 0.0
        %1127 = vmatpush.msra.mxu0 0.0
        %1128 = vmatpush.msra.mxu0 0.0
        %1129 = vmatpush.msra.mxu0 0.0
        %1130 = vmatpush.msra.mxu0 0.0
        %1131 = vmatpush.msra.mxu0 0.0
        %1132 = vmatpush.msra.mxu0 0.0
        %1133 = vmatpush.msra.mxu0 0.0
        %1134 = vmatpush.msra.mxu0 0.0
        %1135 = vmatpush.msra.mxu0 0.0
        %1136 = vmatpush.msra.mxu0 %v1113
        %1137 = vmatpush.msra.mxu0 %v1112
        %1138 = vmatmul.f32.gmra.mxu0 %v1117
        %v1139 = vpop.f32.mrf.mxu0
        %v1140 = vadd.f32 0.0, %v1139
        %1141 = vmatmul.f32.gmra.mxu0 %v1120
        %v1142 = vpop.f32.mrf.mxu0
        %v1143 = vadd.f32 0.0, %v1142
        %1144 = vdwg.mxu0
        %v1145 = vld [vmem:[#allocation8] sm:$0xff]
        %v1146 = vld [vmem:[#allocation8 + $0x8] sm:$0xff]
        %v1148 = vsel %vm361, %v1140, 0
        %v1151 = vsel %vm361, %v1143, 0
        %1153 = vmatpush.msra.mxu0 0.0
        %1154 = vmatpush.msra.mxu0 0.0
        %1155 = vmatpush.msra.mxu0 0.0
        %1156 = vmatpush.msra.mxu0 0.0
        %1157 = vmatpush.msra.mxu0 0.0
        %1158 = vmatpush.msra.mxu0 0.0
        %1159 = vmatpush.msra.mxu0 0.0
        %1160 = vmatpush.msra.mxu0 0.0
        %1161 = vmatpush.msra.mxu0 0.0
        %1162 = vmatpush.msra.mxu0 0.0
        %1163 = vmatpush.msra.mxu0 0.0
        %1164 = vmatpush.msra.mxu0 0.0
        %1165 = vmatpush.msra.mxu0 0.0
        %1166 = vmatpush.msra.mxu0 0.0
        %1167 = vmatpush.msra.mxu0 %v1146
        %1168 = vmatpush.msra.mxu0 %v1145
        %1169 = vmatmul.f32.gmra.mxu0 %v1148
        %v1170 = vpop.f32.mrf.mxu0
        %v1171 = vadd.f32 0.0, %v1170
        %1172 = vmatmul.f32.gmra.mxu0 %v1151
        %v1173 = vpop.f32.mrf.mxu0
        %v1174 = vadd.f32 0.0, %v1173
        %1175 = vdwg.mxu0
        %s1176 = scalar_lea.vmem %s241, 112 [#allocation11]
        %1177 = vst.msk [vmem:[%s1176] sm:$0xff] %vm361, %v1171
        %1178 = vst.msk [vmem:[%s1176 + $0x8] sm:$0xff] %vm361, %v1174
        %s1179 = sand.u32 %s112, 1
        %s1180 = scalar_lea.sflag [#allocation7], %s1179
        %s1181 = sand.u32 %s112, 1
        %s1182 = smul.addr %s1181, 128
        %s1183 = scalar_lea.vmem [#allocation11], %s1182
        // Predicated region
        $region77: #{tpu_custom_call.1} parent=31 // pred_check
          %p1184 = pneg %p122
        $region78: #{tpu_custom_call.1} parent=31 // pred_check_branch
          %1186 = sbr.rel (%p1184) target = $region80
        $region79: #{tpu_custom_call.1} parent=31 // pred_region
          %s1187 = smul.u32 8, %s25
          %1189 = vsyncadd %s1180, 0
          %s1190 = smul.addr %s1187, 2
          %s1191 = smul.addr %s24, 32
          %s1192 = sadd.s32 %s1190, %s1191
          %s1193 = smul.addr %s1192, 8
          %s1194 = scalar_lea.hbm %s4, %s1193
          %s1195 = sshll.u32 %s1183, 4
          %s1196 = int_to_ptr.vmem [resolvable:$true] %s1195
          %s1197 = sshll.u32 %s1194, 4
          %s1198 = int_to_ptr.hbm [resolvable:$true] %s1197
          %1203 = dma.vmem_to_hbm [thread:$0]  %s1196, 2048, %s1198, %s1180, 128, 128, 8
        $region80: #{tpu_custom_call.1} parent=31 // pred_fallthru
          _
      $region32: #{tpu_custom_call.1} parent=5 // pred_fallthru
        _
      %p1204 = scmp.le.s32.totalorder 2, %s15
      // Predicated region
      $region81: #{tpu_custom_call.1} parent=5 // pred_check
        %p1205 = pneg %p1204
      $region82: #{tpu_custom_call.1} parent=5 // pred_check_branch
        %1207 = sbr.rel (%p1205) target = $region84
      $region83: #{tpu_custom_call.1} parent=5 // pred_region
        %s1208 = ssub.s32 %s15, 2
        // Predicated region
        $region85: #{tpu_custom_call.1} parent=83 // pred_check
          %p1209 = pneg %p128
        $region86: #{tpu_custom_call.1} parent=83 // pred_check_branch
          %1211 = sbr.rel (%p1209) target = $region88
        $region87: #{tpu_custom_call.1} parent=83 // pred_region
          %s1212 = sand.u32 %s113, 1
          %s1213 = scalar_lea.sflag [#allocation7], %s1212
          %s1214 = sand.u32 %s113, 1
          %s1215 = smul.addr %s1214, 128
          %s1216 = scalar_lea.vmem [#allocation11], %s1215
          %1218 = dma.done %s1213, 2048
        $region88: #{tpu_custom_call.1} parent=83 // pred_fallthru
          _
      $region84: #{tpu_custom_call.1} parent=5 // pred_fallthru
        _
    $region6: #{tpu_custom_call.1} parent=1 // loop_footer
      %s19 = sadd.s32 1, %s15
    $region7: #{tpu_custom_call.1} parent=1 // loop_footer_branch
      %14 = sbr.rel target = $region3
    $region8: #{tpu_custom_call.1} parent=1 // loop_exit
      _
    %1219 = vsyncpa [#allocation6], 1
    %s1220 = scalar_lea.sflag [#allocation6], 1
    %1221 = vsyncpa %s1220, 1
    %1222 = vsyncpa [#allocation9], 1
    %1223 = vsyncpa [#allocation7], 1
    %s1224 = scalar_lea.sflag [#allocation7], 1
    %1225 = vsyncpa %s1224, 1
  %1226 = vsyncmov [#allocation4]
  %s1227 = vpop.sfrf %1226
  %p1228 = scmp.eq.s32.totalorder %s1227, 0
  %p1229 = pneg %p1228
  %1231 = shalt.err (%p1229)
  %s1232 = scalar_lea.sflag [#allocation4], 1
  %1233 = vsyncmov %s1232
  %s1234 = vpop.sfrf %1233
  %p1235 = scmp.eq.s32.totalorder %s1234, 0
  %p1236 = pneg %p1235
  %1238 = shalt.err (%p1236)

</llo_original>
